<compile_context>
chip_gen: v7x
topology: tpu7x:2x2x1
jax: 0.10.0
libtpu: 0.0.40
codegen_flags: <defaults>
</compile_context>

<pallas_src>
import functools

import numpy as np
import jax
import jax.numpy as jnp
from jax import lax
from jax.experimental import pallas as pl
from jax.experimental.pallas import tpu as pltpu


def _round_up(x, m):
    return (x + m - 1) // m * m


def _conv3x3small_kernel(x_ref, w1_ref, b1_ref, w2_ref, b2_ref, mask_ref,
                         o_ref, pad_ref, *, H, W, nb, S, ALIGN, R2):
    """Fused conv3x3+ELU -> (eval dropout) -> conv3x3+ELU for nb images.

    x_ref:    (nb, Cin, H*W)    NCHW input, spatial flattened onto lanes
    w1_ref:   (3, Cmid, 3*Cin)  conv1 weights grouped by dx; K index = ky*Cin+ci
    b1_ref:   (Cmid, 1)
    w2_ref:   (3, Cout, 3*Cmid) conv2 weights grouped by dx
    b2_ref:   (Cout, 1)
    mask_ref: (2, Lq) f32       row0: valid cols for dx=-1, row1: for dx=+1
    o_ref:    (nb, Cout, H*W)
    pad_ref:  (R2 + 3*Cmid, ALIGN + nb*S) f32 zero-haloed scratch.
              Rows [0, 3*Cin): stage-1 dy planes; rows [R2, R2+3*Cmid): stage-2.
    """
    HW = H * W
    Cin = x_ref.shape[1]
    Cmid = w1_ref.shape[1]
    Lq = (nb - 1) * S + HW          # lane extent of the matmuls (all nb images)

    # Zero halo/seam lanes every step; interiors are fully overwritten below.
    # (Cheaper-looking pid==0-gated init is unsafe when a "parallel" axis is
    # split across TensorCores, since each core has its own scratch.)
    pad_ref[...] = jnp.zeros_like(pad_ref)

    def write_dy_planes(row0, c, b, img):
        # Store `img` three times, lane-shifted by +W / 0 / -W.  A single
        # (3c, Lq) slice of pad_ref at lane offset ALIGN+dx is then the
        # stacked (dy=-1, 0, +1) tap matrix for dx -> the 3 dy taps are
        # contracted inside ONE MXU matmul (im2col without explicit copies).
        base = ALIGN + b * S        # multiple of 128 (ALIGN, S are)
        pad_ref[row0:row0 + c, base + W:base + W + HW] = img            # dy=-1
        pad_ref[row0 + c:row0 + 2 * c, base:base + HW] = img            # dy= 0
        pad_ref[row0 + 2 * c:row0 + 3 * c, base - W:base - W + HW] = img  # dy=+1

    m_left = mask_ref[0:1, :]       # 0.0 where w == 0     (dx = -1 wraps)
    m_right = mask_ref[1:2, :]      # 0.0 where w == W - 1 (dx = +1 wraps)

    def conv3x3_elu(row0, c_i, w_ref, b_ref):
        """3x3 same-padded conv over the dy-plane scratch + bias + ELU."""
        k = 3 * c_i

        def taps(dx):               # (3*c_i, Lq) stacked tap matrix for dx
            return pad_ref[row0:row0 + k, ALIGN + dx:ALIGN + dx + Lq]

        # One matmul per dx group (K = 3*c_i); left/right groups wrap at row
        # edges, so their contribution is masked AFTER the dot: 2 multiplies
        # on (c_o, Lq) instead of 6 per-tap selects on (c_i, Lq).
        acc = b_ref[...] + jnp.dot(w_ref[1], taps(0),
                                   preferred_element_type=jnp.float32)
        acc = acc + m_left * jnp.dot(w_ref[0], taps(-1),
                                     preferred_element_type=jnp.float32)
        acc = acc + m_right * jnp.dot(w_ref[2], taps(1),
                                      preferred_element_type=jnp.float32)
        # ELU(alpha=1); clamp so the unselected exp branch cannot overflow.
        return jnp.where(acc > 0.0, acc, jnp.exp(jnp.minimum(acc, 0.0)) - 1.0)

    # ---- Stage 1: conv1 (Cin -> Cmid) + ELU --------------------------------
    for b in range(nb):
        write_dy_planes(0, Cin, b, x_ref[b].astype(jnp.float32))
    h = conv3x3_elu(0, Cin, w1_ref, b1_ref)          # (Cmid, Lq); seams junk

    # TODO(synk): Dropout(p=0.2) is eval-mode identity; training-mode masking
    # + 1/(1-p) scaling (pltpu.prng_*) is not implemented.

    # ---- Stage 2: conv2 (Cmid -> Cout) + ELU -------------------------------
    # Per-image slices keep the inter-image seam lanes zero in the scratch;
    # those seams act as the dy=+-1 zero padding between adjacent images.
    for b in range(nb):
        write_dy_planes(R2, Cmid, b, h[:, b * S:b * S + HW])
    y = conv3x3_elu(R2, Cmid, w2_ref, b2_ref)        # (Cout, Lq)

    for b in range(nb):
        # b*S is a multiple of 128 -> aligned read; HW-wide lane-dense store.
        o_ref[b] = y[:, b * S:b * S + HW].astype(o_ref.dtype)


def _hwio_to_dx_groups(w_hwio):
    """(3, 3, Cin, Cout) HWIO -> (3, Cout, 3*Cin): [dx+1, co, ky*Cin + ci]."""
    kh, kw, ci, co = w_hwio.shape
    return jnp.transpose(w_hwio, (1, 3, 0, 2)).reshape(kw, co, kh * ci)


def _pick_nb(N, Cin, Cmid, Cout, HW, S, align, itemsize, budget=10 << 20):
    """Largest divisor of N whose double-buffered blocks + scratch fit budget."""
    rows = _round_up(3 * Cin, 8) + 3 * Cmid
    nb = 1
    for cand in range(1, N + 1):
        if N % cand:
            continue
        blocks = 2 * cand * (Cin + Cout) * HW * itemsize   # 2x-buffered in+out
        scratch = rows * (align + cand * S) * 4
        if blocks + scratch <= budget:
            nb = cand
    return nb


def conv3x3small_forward(x_nchw, params):
    """Conv3x3Small forward. Input/output in NCHW (PyTorch layout)."""
    N, Cin, H, W = x_nchw.shape
    Cmid = params["b1"].shape[0]
    Cout = params["b2"].shape[0]
    HW = H * W

    ALIGN = _round_up(W + 1, 128)       # leading halo, 128-lane aligned
    S = _round_up(HW + W + 1, 128)      # per-image lane stride (incl. zero seam)
    R2 = _round_up(3 * Cin, 8)          # sublane-aligned start of stage-2 planes

    nb = _pick_nb(N, Cin, Cmid, Cout, HW, S, ALIGN, x_nchw.dtype.itemsize)
    Lq = (nb - 1) * S + HW
    pad_rows = R2 + 3 * Cmid
    pad_len = ALIGN + nb * S

    # Row-major NCHW -> (N, C, H*W): free reshape, spatial maps to lanes.
    x_flat = x_nchw.reshape(N, Cin, HW)

    w1 = _hwio_to_dx_groups(params["w1"])    # (3, Cmid, 3*Cin)
    w2 = _hwio_to_dx_groups(params["w2"])    # (3, Cout, 3*Cmid)
    b1 = params["b1"].reshape(Cmid, 1)
    b2 = params["b2"].reshape(Cout, 1)

    # Static per-column validity masks for the dx=-1 / dx=+1 groups, computed
    # on the host so the kernel does no integer iota/mod work at all.
    q = np.arange(Lq)
    p = q % S                                 # position within an image slot
    w_pos = p % W
    valid = p < HW                            # seam columns: value irrelevant
    masks = jnp.asarray(np.stack([
        np.where(valid, (w_pos != 0).astype(np.float32), 1.0),        # dx=-1
        np.where(valid, (w_pos != W - 1).astype(np.float32), 1.0),    # dx=+1
    ]).astype(np.float32))

    kernel = functools.partial(_conv3x3small_kernel, H=H, W=W, nb=nb,
                               S=S, ALIGN=ALIGN, R2=R2)

    out = pl.pallas_call(
        kernel,
        out_shape=jax.ShapeDtypeStruct((N, Cout, HW), x_nchw.dtype),
        grid_spec=pltpu.PrefetchScalarGridSpec(
            num_scalar_prefetch=0,
            grid=(N // nb,),
            in_specs=[
                pl.BlockSpec((nb, Cin, HW), lambda n: (n, 0, 0)),
                pl.BlockSpec((3, Cmid, 3 * Cin), lambda n: (0, 0, 0)),
                pl.BlockSpec((Cmid, 1), lambda n: (0, 0)),
                pl.BlockSpec((3, Cout, 3 * Cmid), lambda n: (0, 0, 0)),
                pl.BlockSpec((Cout, 1), lambda n: (0, 0)),
                pl.BlockSpec((2, Lq), lambda n: (0, 0)),
            ],
            out_specs=pl.BlockSpec((nb, Cout, HW), lambda n: (n, 0, 0)),
            scratch_shapes=[pltpu.VMEM((pad_rows, pad_len), jnp.float32)],
        ),
        compiler_params=pltpu.CompilerParams(
            dimension_semantics=("parallel",),
            vmem_limit_bytes=32 * 1024 * 1024),
    )(x_flat, w1, b1, w2, b2, masks)

    return out.reshape(N, Cout, H, W)


def init_params(key, in_feat, out_feat, dtype=jnp.float32):
    """Deterministic parameter init (Kaiming-uniform-ish, like nn.Conv2d default)."""
    k1, k2, k3, k4 = jax.random.split(key, 4)
    fan1 = in_feat * 9
    fan2 = out_feat * 9
    lim1 = 1.0 / jnp.sqrt(fan1)
    lim2 = 1.0 / jnp.sqrt(fan2)
    # weights stored HWIO (3, 3, Cin, Cout)
    w1 = jax.random.uniform(k1, (3, 3, in_feat, out_feat), dtype, -lim1, lim1)
    b1 = jax.random.uniform(k2, (out_feat,), dtype, -lim1, lim1)
    w2 = jax.random.uniform(k3, (3, 3, out_feat, out_feat), dtype, -lim2, lim2)
    b2 = jax.random.uniform(k4, (out_feat,), dtype, -lim2, lim2)
    return {"w1": w1, "b1": b1, "w2": w2, "b2": b2}


def _reference_forward(x_nchw, params):
    """Pure-JAX reference (lax conv, full f32 precision) for correctness checking."""
    def conv(x, w, b):
        w_oihw = jnp.transpose(w, (3, 2, 0, 1))
        y = lax.conv_general_dilated(
            x, w_oihw, window_strides=(1, 1), padding=((1, 1), (1, 1)),
            dimension_numbers=("NCHW", "OIHW", "NCHW"),
            precision=lax.Precision.HIGHEST)
        y = y + b[None, :, None, None]
        return jnp.where(y > 0, y, jnp.expm1(jnp.minimum(y, 0.0)))
    y = conv(x_nchw, params["w1"], params["b1"])
    y = conv(y, params["w2"], params["b2"])
    return y


if __name__ == "__main__":
    key = jax.random.PRNGKey(0)
    k_in, k_par = jax.random.split(key)

    N, Cin, Cout, H, W = 2, 4, 8, 16, 16
    x = jax.random.normal(k_in, (N, Cin, H, W), dtype=jnp.float32)
    params = init_params(k_par, Cin, Cout)

    out = jax.block_until_ready(conv3x3small_forward(x, params))

    ref = _reference_forward(x, params)
    assert out.shape == (N, Cout, H, W)
    assert jnp.allclose(out, ref, atol=1e-3, rtol=1e-3)

    print("KERNEL_OK")
</pallas_src>

<mosaic_0001>
module attributes {stable_mosaic.version = 11 : i64} {
  func.func @_conv3x3small_kernel(%arg0: i32, %arg1: memref<2x4x256xf32, #tpu.memory_space<vmem>>, %arg2: memref<3x8x12xf32, #tpu.memory_space<vmem>>, %arg3: memref<8x1xf32, #tpu.memory_space<vmem>>, %arg4: memref<3x8x24xf32, #tpu.memory_space<vmem>>, %arg5: memref<8x1xf32, #tpu.memory_space<vmem>>, %arg6: memref<2x640xf32, #tpu.memory_space<vmem>>, %arg7: memref<2x8x256xf32, #tpu.memory_space<vmem>>, %arg8: memref<40x896xf32, #tpu.memory_space<vmem>>) attributes {dimension_semantics = [#tpu.dimension_semantics<parallel>], iteration_bounds = array<i64: 1>, scalar_prefetch = 0 : i64, scratch_operands = 1 : i64, tpu.core_type = #tpu.core_type<tc>, window_params = [{transform_indices = @transform_0, window_bounds = array<i64: 2, 4, 256>}, {pipeline_mode = #tpu.pipeline_mode<synchronous>, transform_indices = @transform_1, window_bounds = array<i64: 3, 8, 12>}, {pipeline_mode = #tpu.pipeline_mode<synchronous>, transform_indices = @transform_2, window_bounds = array<i64: 8, 1>}, {pipeline_mode = #tpu.pipeline_mode<synchronous>, transform_indices = @transform_3, window_bounds = array<i64: 3, 8, 24>}, {pipeline_mode = #tpu.pipeline_mode<synchronous>, transform_indices = @transform_4, window_bounds = array<i64: 8, 1>}, {pipeline_mode = #tpu.pipeline_mode<synchronous>, transform_indices = @transform_5, window_bounds = array<i64: 2, 640>}, {transform_indices = @transform_6, window_bounds = array<i64: 2, 8, 256>}]} {
    %cst = arith.constant 0.000000e+00 : f32
    %0 = vector.broadcast %cst : f32 to vector<40x896xf32>
    %c0 = arith.constant 0 : index
    %c0_0 = arith.constant 0 : index
    %1 = vector.load %arg8[%c0, %c0_0] : memref<40x896xf32, #tpu.memory_space<vmem>>, vector<40x896xf32>
    tpu.vector_store %arg8[%c0, %c0_0], %0 {strides = array<i32>} : memref<40x896xf32, #tpu.memory_space<vmem>>, vector<40x896xf32>,
    %c0_1 = arith.constant 0 : index
    %c0_2 = arith.constant 0 : index
    %2 = vector.load %arg6[%c0_1, %c0_2] : memref<2x640xf32, #tpu.memory_space<vmem>>, vector<1x640xf32>
    %c1 = arith.constant 1 : index
    %c0_3 = arith.constant 0 : index
    %3 = vector.load %arg6[%c1, %c0_3] : memref<2x640xf32, #tpu.memory_space<vmem>>, vector<1x640xf32>
    %c0_4 = arith.constant 0 : index
    %c0_5 = arith.constant 0 : index
    %c0_6 = arith.constant 0 : index
    %4 = vector.load %arg1[%c0_4, %c0_5, %c0_6] : memref<2x4x256xf32, #tpu.memory_space<vmem>>, vector<1x4x256xf32>
    %5 = vector.shape_cast %4 : vector<1x4x256xf32> to vector<4x256xf32>
    %c0_7 = arith.constant 0 : index
    %c144 = arith.constant 144 : index
    %6 = vector.load %arg8[%c0_7, %c144] : memref<40x896xf32, #tpu.memory_space<vmem>>, vector<4x256xf32>
    tpu.vector_store %arg8[%c0_7, %c144], %5 {strides = array<i32>} : memref<40x896xf32, #tpu.memory_space<vmem>>, vector<4x256xf32>,
    %c4 = arith.constant 4 : index
    %c128 = arith.constant 128 : index
    %7 = vector.load %arg8[%c4, %c128] : memref<40x896xf32, #tpu.memory_space<vmem>>, vector<4x256xf32>
    tpu.vector_store %arg8[%c4, %c128], %5 {strides = array<i32>} : memref<40x896xf32, #tpu.memory_space<vmem>>, vector<4x256xf32>,
    %c8 = arith.constant 8 : index
    %c112 = arith.constant 112 : index
    %8 = vector.load %arg8[%c8, %c112] : memref<40x896xf32, #tpu.memory_space<vmem>>, vector<4x256xf32>
    tpu.vector_store %arg8[%c8, %c112], %5 {strides = array<i32>} : memref<40x896xf32, #tpu.memory_space<vmem>>, vector<4x256xf32>,
    %c1_8 = arith.constant 1 : index
    %c0_9 = arith.constant 0 : index
    %c0_10 = arith.constant 0 : index
    %9 = vector.load %arg1[%c1_8, %c0_9, %c0_10] : memref<2x4x256xf32, #tpu.memory_space<vmem>>, vector<1x4x256xf32>
    %10 = vector.shape_cast %9 : vector<1x4x256xf32> to vector<4x256xf32>
    %c0_11 = arith.constant 0 : index
    %c528 = arith.constant 528 : index
    %11 = vector.load %arg8[%c0_11, %c528] : memref<40x896xf32, #tpu.memory_space<vmem>>, vector<4x256xf32>
    tpu.vector_store %arg8[%c0_11, %c528], %10 {strides = array<i32>} : memref<40x896xf32, #tpu.memory_space<vmem>>, vector<4x256xf32>,
    %c4_12 = arith.constant 4 : index
    %c512 = arith.constant 512 : index
    %12 = vector.load %arg8[%c4_12, %c512] : memref<40x896xf32, #tpu.memory_space<vmem>>, vector<4x256xf32>
    tpu.vector_store %arg8[%c4_12, %c512], %10 {strides = array<i32>} : memref<40x896xf32, #tpu.memory_space<vmem>>, vector<4x256xf32>,
    %c8_13 = arith.constant 8 : index
    %c496 = arith.constant 496 : index
    %13 = vector.load %arg8[%c8_13, %c496] : memref<40x896xf32, #tpu.memory_space<vmem>>, vector<4x256xf32>
    tpu.vector_store %arg8[%c8_13, %c496], %10 {strides = array<i32>} : memref<40x896xf32, #tpu.memory_space<vmem>>, vector<4x256xf32>,
    %c0_14 = arith.constant 0 : index
    %c0_15 = arith.constant 0 : index
    %14 = vector.load %arg3[%c0_14, %c0_15] : memref<8x1xf32, #tpu.memory_space<vmem>>, vector<8x1xf32>
    %c1_16 = arith.constant 1 : index
    %c0_17 = arith.constant 0 : index
    %c0_18 = arith.constant 0 : index
    %15 = vector.load %arg2[%c1_16, %c0_17, %c0_18] : memref<3x8x12xf32, #tpu.memory_space<vmem>>, vector<1x8x12xf32>
    %16 = vector.shape_cast %15 : vector<1x8x12xf32> to vector<8x12xf32>
    %c0_19 = arith.constant 0 : index
    %c128_20 = arith.constant 128 : index
    %17 = vector.load %arg8[%c0_19, %c128_20] : memref<40x896xf32, #tpu.memory_space<vmem>>, vector<12x640xf32>
    %cst_21 = arith.constant dense<0.000000e+00> : vector<8x640xf32>
    %18 = tpu.matmul %16, %17, %cst_21 {dimension_numbers = #tpu.dot_dimension_numbers<[1], [0], [0], [1], [0, 0, 1, 1], [], []>} : vector<8x12xf32>, vector<12x640xf32>, vector<8x640xf32> -> vector<8x640xf32>
    %19 = vector.broadcast %14 : vector<8x1xf32> to vector<8x640xf32>
    %20 = arith.addf %19, %18 : vector<8x640xf32>
    %c0_22 = arith.constant 0 : index
    %c0_23 = arith.constant 0 : index
    %c0_24 = arith.constant 0 : index
    %21 = vector.load %arg2[%c0_22, %c0_23, %c0_24] : memref<3x8x12xf32, #tpu.memory_space<vmem>>, vector<1x8x12xf32>
    %22 = vector.shape_cast %21 : vector<1x8x12xf32> to vector<8x12xf32>
    %c0_25 = arith.constant 0 : index
    %c127 = arith.constant 127 : index
    %23 = vector.load %arg8[%c0_25, %c127] : memref<40x896xf32, #tpu.memory_space<vmem>>, vector<12x640xf32>
    %cst_26 = arith.constant dense<0.000000e+00> : vector<8x640xf32>
    %24 = tpu.matmul %22, %23, %cst_26 {dimension_numbers = #tpu.dot_dimension_numbers<[1], [0], [0], [1], [0, 0, 1, 1], [], []>} : vector<8x12xf32>, vector<12x640xf32>, vector<8x640xf32> -> vector<8x640xf32>
    %25 = vector.broadcast %2 : vector<1x640xf32> to vector<8x640xf32>
    %26 = arith.mulf %25, %24 : vector<8x640xf32>
    %27 = arith.addf %20, %26 : vector<8x640xf32>
    %c2 = arith.constant 2 : index
    %c0_27 = arith.constant 0 : index
    %c0_28 = arith.constant 0 : index
    %28 = vector.load %arg2[%c2, %c0_27, %c0_28] : memref<3x8x12xf32, #tpu.memory_space<vmem>>, vector<1x8x12xf32>
    %29 = vector.shape_cast %28 : vector<1x8x12xf32> to vector<8x12xf32>
    %c0_29 = arith.constant 0 : index
    %c129 = arith.constant 129 : index
    %30 = vector.load %arg8[%c0_29, %c129] : memref<40x896xf32, #tpu.memory_space<vmem>>, vector<12x640xf32>
    %cst_30 = arith.constant dense<0.000000e+00> : vector<8x640xf32>
    %31 = tpu.matmul %29, %30, %cst_30 {dimension_numbers = #tpu.dot_dimension_numbers<[1], [0], [0], [1], [0, 0, 1, 1], [], []>} : vector<8x12xf32>, vector<12x640xf32>, vector<8x640xf32> -> vector<8x640xf32>
    %32 = vector.broadcast %3 : vector<1x640xf32> to vector<8x640xf32>
    %33 = arith.mulf %32, %31 : vector<8x640xf32>
    %34 = arith.addf %27, %33 : vector<8x640xf32>
    %cst_31 = arith.constant 0.000000e+00 : f32
    %35 = vector.broadcast %cst_31 : f32 to vector<8x640xf32>
    %36 = arith.cmpf ogt, %34, %35 : vector<8x640xf32>
    %cst_32 = arith.constant 0.000000e+00 : f32
    %37 = vector.broadcast %cst_32 : f32 to vector<8x640xf32>
    %38 = arith.minimumf %34, %37 : vector<8x640xf32>
    %39 = math.exp %38 : vector<8x640xf32>
    %cst_33 = arith.constant 1.000000e+00 : f32
    %40 = vector.broadcast %cst_33 : f32 to vector<8x640xf32>
    %41 = arith.subf %39, %40 : vector<8x640xf32>
    %42 = arith.select %36, %34, %41 : vector<8x640xi1>, vector<8x640xf32>
    %43 = vector.extract_strided_slice %42 {offsets = [0, 0], sizes = [8, 256], strides = [1, 1]} : vector<8x640xf32> to vector<8x256xf32>
    %c16 = arith.constant 16 : index
    %c144_34 = arith.constant 144 : index
    %44 = vector.load %arg8[%c16, %c144_34] : memref<40x896xf32, #tpu.memory_space<vmem>>, vector<8x256xf32>
    tpu.vector_store %arg8[%c16, %c144_34], %43 {strides = array<i32>} : memref<40x896xf32, #tpu.memory_space<vmem>>, vector<8x256xf32>,
    %c24 = arith.constant 24 : index
    %c128_35 = arith.constant 128 : index
    %45 = vector.load %arg8[%c24, %c128_35] : memref<40x896xf32, #tpu.memory_space<vmem>>, vector<8x256xf32>
    tpu.vector_store %arg8[%c24, %c128_35], %43 {strides = array<i32>} : memref<40x896xf32, #tpu.memory_space<vmem>>, vector<8x256xf32>,
    %c32 = arith.constant 32 : index
    %c112_36 = arith.constant 112 : index
    %46 = vector.load %arg8[%c32, %c112_36] : memref<40x896xf32, #tpu.memory_space<vmem>>, vector<8x256xf32>
    tpu.vector_store %arg8[%c32, %c112_36], %43 {strides = array<i32>} : memref<40x896xf32, #tpu.memory_space<vmem>>, vector<8x256xf32>,
    %47 = vector.extract_strided_slice %42 {offsets = [0, 384], sizes = [8, 256], strides = [1, 1]} : vector<8x640xf32> to vector<8x256xf32>
    %c16_37 = arith.constant 16 : index
    %c528_38 = arith.constant 528 : index
    %48 = vector.load %arg8[%c16_37, %c528_38] : memref<40x896xf32, #tpu.memory_space<vmem>>, vector<8x256xf32>
    tpu.vector_store %arg8[%c16_37, %c528_38], %47 {strides = array<i32>} : memref<40x896xf32, #tpu.memory_space<vmem>>, vector<8x256xf32>,
    %c24_39 = arith.constant 24 : index
    %c512_40 = arith.constant 512 : index
    %49 = vector.load %arg8[%c24_39, %c512_40] : memref<40x896xf32, #tpu.memory_space<vmem>>, vector<8x256xf32>
    tpu.vector_store %arg8[%c24_39, %c512_40], %47 {strides = array<i32>} : memref<40x896xf32, #tpu.memory_space<vmem>>, vector<8x256xf32>,
    %c32_41 = arith.constant 32 : index
    %c496_42 = arith.constant 496 : index
    %50 = vector.load %arg8[%c32_41, %c496_42] : memref<40x896xf32, #tpu.memory_space<vmem>>, vector<8x256xf32>
    tpu.vector_store %arg8[%c32_41, %c496_42], %47 {strides = array<i32>} : memref<40x896xf32, #tpu.memory_space<vmem>>, vector<8x256xf32>,
    %c0_43 = arith.constant 0 : index
    %c0_44 = arith.constant 0 : index
    %51 = vector.load %arg5[%c0_43, %c0_44] : memref<8x1xf32, #tpu.memory_space<vmem>>, vector<8x1xf32>
    %c1_45 = arith.constant 1 : index
    %c0_46 = arith.constant 0 : index
    %c0_47 = arith.constant 0 : index
    %52 = vector.load %arg4[%c1_45, %c0_46, %c0_47] : memref<3x8x24xf32, #tpu.memory_space<vmem>>, vector<1x8x24xf32>
    %53 = vector.shape_cast %52 : vector<1x8x24xf32> to vector<8x24xf32>
    %c16_48 = arith.constant 16 : index
    %c128_49 = arith.constant 128 : index
    %54 = vector.load %arg8[%c16_48, %c128_49] : memref<40x896xf32, #tpu.memory_space<vmem>>, vector<24x640xf32>
    %cst_50 = arith.constant dense<0.000000e+00> : vector<8x640xf32>
    %55 = tpu.matmul %53, %54, %cst_50 {dimension_numbers = #tpu.dot_dimension_numbers<[1], [0], [0], [1], [0, 0, 1, 1], [], []>} : vector<8x24xf32>, vector<24x640xf32>, vector<8x640xf32> -> vector<8x640xf32>
    %56 = vector.broadcast %51 : vector<8x1xf32> to vector<8x640xf32>
    %57 = arith.addf %56, %55 : vector<8x640xf32>
    %c0_51 = arith.constant 0 : index
    %c0_52 = arith.constant 0 : index
    %c0_53 = arith.constant 0 : index
    %58 = vector.load %arg4[%c0_51, %c0_52, %c0_53] : memref<3x8x24xf32, #tpu.memory_space<vmem>>, vector<1x8x24xf32>
    %59 = vector.shape_cast %58 : vector<1x8x24xf32> to vector<8x24xf32>
    %c16_54 = arith.constant 16 : index
    %c127_55 = arith.constant 127 : index
    %60 = vector.load %arg8[%c16_54, %c127_55] : memref<40x896xf32, #tpu.memory_space<vmem>>, vector<24x640xf32>
    %cst_56 = arith.constant dense<0.000000e+00> : vector<8x640xf32>
    %61 = tpu.matmul %59, %60, %cst_56 {dimension_numbers = #tpu.dot_dimension_numbers<[1], [0], [0], [1], [0, 0, 1, 1], [], []>} : vector<8x24xf32>, vector<24x640xf32>, vector<8x640xf32> -> vector<8x640xf32>
    %62 = vector.broadcast %2 : vector<1x640xf32> to vector<8x640xf32>
    %63 = arith.mulf %62, %61 : vector<8x640xf32>
    %64 = arith.addf %57, %63 : vector<8x640xf32>
    %c2_57 = arith.constant 2 : index
    %c0_58 = arith.constant 0 : index
    %c0_59 = arith.constant 0 : index
    %65 = vector.load %arg4[%c2_57, %c0_58, %c0_59] : memref<3x8x24xf32, #tpu.memory_space<vmem>>, vector<1x8x24xf32>
    %66 = vector.shape_cast %65 : vector<1x8x24xf32> to vector<8x24xf32>
    %c16_60 = arith.constant 16 : index
    %c129_61 = arith.constant 129 : index
    %67 = vector.load %arg8[%c16_60, %c129_61] : memref<40x896xf32, #tpu.memory_space<vmem>>, vector<24x640xf32>
    %cst_62 = arith.constant dense<0.000000e+00> : vector<8x640xf32>
    %68 = tpu.matmul %66, %67, %cst_62 {dimension_numbers = #tpu.dot_dimension_numbers<[1], [0], [0], [1], [0, 0, 1, 1], [], []>} : vector<8x24xf32>, vector<24x640xf32>, vector<8x640xf32> -> vector<8x640xf32>
    %69 = vector.broadcast %3 : vector<1x640xf32> to vector<8x640xf32>
    %70 = arith.mulf %69, %68 : vector<8x640xf32>
    %71 = arith.addf %64, %70 : vector<8x640xf32>
    %cst_63 = arith.constant 0.000000e+00 : f32
    %72 = vector.broadcast %cst_63 : f32 to vector<8x640xf32>
    %73 = arith.cmpf ogt, %71, %72 : vector<8x640xf32>
    %cst_64 = arith.constant 0.000000e+00 : f32
    %74 = vector.broadcast %cst_64 : f32 to vector<8x640xf32>
    %75 = arith.minimumf %71, %74 : vector<8x640xf32>
    %76 = math.exp %75 : vector<8x640xf32>
    %cst_65 = arith.constant 1.000000e+00 : f32
    %77 = vector.broadcast %cst_65 : f32 to vector<8x640xf32>
    %78 = arith.subf %76, %77 : vector<8x640xf32>
    %79 = arith.select %73, %71, %78 : vector<8x640xi1>, vector<8x640xf32>
    %80 = vector.extract_strided_slice %79 {offsets = [0, 0], sizes = [8, 256], strides = [1, 1]} : vector<8x640xf32> to vector<8x256xf32>
    %c0_66 = arith.constant 0 : index
    %c0_67 = arith.constant 0 : index
    %c0_68 = arith.constant 0 : index
    %81 = vector.load %arg7[%c0_66, %c0_67, %c0_68] : memref<2x8x256xf32, #tpu.memory_space<vmem>>, vector<1x8x256xf32>
    %82 = vector.shape_cast %81 : vector<1x8x256xf32> to vector<8x256xf32>
    %83 = vector.shape_cast %80 : vector<8x256xf32> to vector<1x8x256xf32>
    tpu.vector_store %arg7[%c0_66, %c0_67, %c0_68], %83 {strides = array<i32>} : memref<2x8x256xf32, #tpu.memory_space<vmem>>, vector<1x8x256xf32>,
    %84 = vector.extract_strided_slice %79 {offsets = [0, 384], sizes = [8, 256], strides = [1, 1]} : vector<8x640xf32> to vector<8x256xf32>
    %c1_69 = arith.constant 1 : index
    %c0_70 = arith.constant 0 : index
    %c0_71 = arith.constant 0 : index
    %85 = vector.load %arg7[%c1_69, %c0_70, %c0_71] : memref<2x8x256xf32, #tpu.memory_space<vmem>>, vector<1x8x256xf32>
    %86 = vector.shape_cast %85 : vector<1x8x256xf32> to vector<8x256xf32>
    %87 = vector.shape_cast %84 : vector<8x256xf32> to vector<1x8x256xf32>
    tpu.vector_store %arg7[%c1_69, %c0_70, %c0_71], %87 {strides = array<i32>} : memref<2x8x256xf32, #tpu.memory_space<vmem>>, vector<1x8x256xf32>,
    return
  }
  func.func @transform_0(%arg0: i32) -> (i32, i32, i32) {
    %c0_i32 = arith.constant 0 : i32
    %c0_i32_0 = arith.constant 0 : i32
    %c0_i32_1 = arith.constant 0 : i32
    return %arg0, %c0_i32, %c0_i32_0 : i32, i32, i32
  }
  func.func @transform_1(%arg0: i32) -> (i32, i32, i32) {
    %c0_i32 = arith.constant 0 : i32
    %c0_i32_0 = arith.constant 0 : i32
    %c0_i32_1 = arith.constant 0 : i32
    %c0_i32_2 = arith.constant 0 : i32
    return %c0_i32, %c0_i32_0, %c0_i32_1 : i32, i32, i32
  }
  func.func @transform_2(%arg0: i32) -> (i32, i32) {
    %c0_i32 = arith.constant 0 : i32
    %c0_i32_0 = arith.constant 0 : i32
    %c0_i32_1 = arith.constant 0 : i32
    return %c0_i32, %c0_i32_0 : i32, i32
  }
  func.func @transform_3(%arg0: i32) -> (i32, i32, i32) {
    %c0_i32 = arith.constant 0 : i32
    %c0_i32_0 = arith.constant 0 : i32
    %c0_i32_1 = arith.constant 0 : i32
    %c0_i32_2 = arith.constant 0 : i32
    return %c0_i32, %c0_i32_0, %c0_i32_1 : i32, i32, i32
  }
  func.func @transform_4(%arg0: i32) -> (i32, i32) {
    %c0_i32 = arith.constant 0 : i32
    %c0_i32_0 = arith.constant 0 : i32
    %c0_i32_1 = arith.constant 0 : i32
    return %c0_i32, %c0_i32_0 : i32, i32
  }
  func.func @transform_5(%arg0: i32) -> (i32, i32) {
    %c0_i32 = arith.constant 0 : i32
    %c0_i32_0 = arith.constant 0 : i32
    %c0_i32_1 = arith.constant 0 : i32
    return %c0_i32, %c0_i32_0 : i32, i32
  }
  func.func @transform_6(%arg0: i32) -> (i32, i32, i32) {
    %c0_i32 = arith.constant 0 : i32
    %c0_i32_0 = arith.constant 0 : i32
    %c0_i32_1 = arith.constant 0 : i32
    return %arg0, %c0_i32, %c0_i32_0 : i32, i32, i32
  }
}

</mosaic_0001>

<llo_original>
// kernel: tpu_custom_call.1
$region0: #{tpu_custom_call.1}
  #allocation0 [shape = 'u32[]', space=smem, size = 0x4, offset = 0x4, fixed_abs, tag = 'smem constant byte address 0x4 - core index']
  #allocation1 [shape = 'u32[144,128]{1,0:T(1,128)}', space=vmem, size = 0x12000, scoped, tag = 'internal scratch']
  #allocation2 [shape = 'f32[40,896]{1,0:T(8,128)}', space=vmem, size = 0x23000, scoped, tag = 'scratch operand']
  %s0 = inlined_call_operand.hbm [shape: f32[2,4,256], index: 0, kind: input, shape index: {}]
  %s1 = inlined_call_operand.hbm [shape: f32[3,8,12], index: 1, kind: input, shape index: {}]
  %s2 = inlined_call_operand.vmem [shape: f32[8,1], index: 2, kind: input, shape index: {}]
  %s3 = inlined_call_operand.vmem [shape: f32[3,8,24], index: 3, kind: input, shape index: {}]
  %s4 = inlined_call_operand.vmem [shape: f32[8,1], index: 4, kind: input, shape index: {}]
  %s5 = inlined_call_operand.vmem [shape: f32[2,640], index: 5, kind: input, shape index: {}]
  %s6 = inlined_call_operand.hbm [shape: f32[2,8,256], index: 6, kind: output, shape index: {}]
  %s7 = sld [smem:[#allocation0]]
  $region42: #{tpu_custom_call.1} parent=0
    _
  %s9 = ssub.s32 1, %s7
  %s10 = scalar_select 0, %s9, %s7
  $region1: #{tpu_custom_call.1} parent=0
    #allocation3 [shape = 'u8[8192]{0}', space=vmem, size = 0x2000, scoped, tag = 'input window, operand 0, single buffered']
    #allocation4 [shape = 's32[1]{0}', space=sflag, size = 0x4, scoped, tag = 'scoped memory for tpu_custom_call.1']
    #allocation5 [shape = 's32[1]{0}', space=sflag, size = 0x4, scoped, tag = 'scoped memory for tpu_custom_call.1']
    #allocation6 [shape = 'u8[12288]{0}', space=vmem, size = 0x3000, scoped, tag = 'input window, operand 1, single buffered']
    #allocation7 [shape = 's32[1]{0}', space=sflag, size = 0x4, scoped, tag = 'scoped memory for tpu_custom_call.1']
    #allocation8 [shape = 'u8[16384]{0}', space=vmem, size = 0x4000, scoped, tag = 'output window, operand 0, single buffered']
    %11 = vsyncpa [#allocation4], 0
    %12 = vsyncpa [#allocation7], 0
    %13 = vsyncpa [#allocation5], 0
    // Predicated region
    $region2: #{tpu_custom_call.1} parent=1 // pred_check
      _
    $region3: #{tpu_custom_call.1} parent=1 // pred_check_branch
      %15 = sbr.rel (0) target = $region5
    $region4: #{tpu_custom_call.1} parent=1 // pred_region
      %s17 = ssub.s32 256, 256
      %18 = vsyncadd [#allocation4], %s17
      %s19 = sshll.u32 [#allocation3], 4
      %s20 = int_to_ptr.vmem [resolvable:$true] %s19
      %25 = dma.hbm_to_vmem [thread:$0]  %s0, 256, %s20, [#allocation4], 128, 128, 8
    $region5: #{tpu_custom_call.1} parent=1 // pred_fallthru
      _
    // Predicated region
    $region6: #{tpu_custom_call.1} parent=1 // pred_check
      _
    $region7: #{tpu_custom_call.1} parent=1 // pred_check_branch
      %27 = sbr.rel (0) target = $region9
    $region8: #{tpu_custom_call.1} parent=1 // pred_region
      %s29 = ssub.s32 384, 384
      %30 = vsyncadd [#allocation7], %s29
      %s31 = sshll.u32 [#allocation6], 4
      %s32 = int_to_ptr.vmem [resolvable:$true] %s31
      %37 = dma.hbm_to_vmem [thread:$0]  %s1, 384, %s32, [#allocation7], 128, 128, 8
    $region9: #{tpu_custom_call.1} parent=1 // pred_fallthru
      _
    // Predicated region
    $region10: #{tpu_custom_call.1} parent=1 // pred_check
      _
    $region11: #{tpu_custom_call.1} parent=1 // pred_check_branch
      %39 = sbr.rel (0) target = $region13
    $region12: #{tpu_custom_call.1} parent=1 // pred_region
      _
    $region13: #{tpu_custom_call.1} parent=1 // pred_fallthru
      _
    // Predicated region
    $region14: #{tpu_custom_call.1} parent=1 // pred_check
      _
    $region15: #{tpu_custom_call.1} parent=1 // pred_check_branch
      %41 = sbr.rel (0) target = $region17
    $region16: #{tpu_custom_call.1} parent=1 // pred_region
      _
    $region17: #{tpu_custom_call.1} parent=1 // pred_fallthru
      _
    // Predicated region
    $region18: #{tpu_custom_call.1} parent=1 // pred_check
      _
    $region19: #{tpu_custom_call.1} parent=1 // pred_check_branch
      %43 = sbr.rel (0) target = $region21
    $region20: #{tpu_custom_call.1} parent=1 // pred_region
      _
    $region21: #{tpu_custom_call.1} parent=1 // pred_fallthru
      _
    // Predicated region
    $region22: #{tpu_custom_call.1} parent=1 // pred_check
      _
    $region23: #{tpu_custom_call.1} parent=1 // pred_check_branch
      %45 = sbr.rel (0) target = $region25
    $region24: #{tpu_custom_call.1} parent=1 // pred_region
      _
    $region25: #{tpu_custom_call.1} parent=1 // pred_fallthru
      _
    // Predicated region
    $region26: #{tpu_custom_call.1} parent=1 // pred_check
      _
    $region27: #{tpu_custom_call.1} parent=1 // pred_check_branch
      %47 = sbr.rel (0) target = $region29
    $region28: #{tpu_custom_call.1} parent=1 // pred_region
      %48 = dma.done [#allocation4], 256
    $region29: #{tpu_custom_call.1} parent=1 // pred_fallthru
      _
    // Predicated region
    $region30: #{tpu_custom_call.1} parent=1 // pred_check
      _
    $region31: #{tpu_custom_call.1} parent=1 // pred_check_branch
      %50 = sbr.rel (0) target = $region33
    $region32: #{tpu_custom_call.1} parent=1 // pred_region
      %51 = dma.done [#allocation7], 384
    $region33: #{tpu_custom_call.1} parent=1 // pred_fallthru
      _
    %52 = vst [vmem:[#allocation2] sm:$0xff] 0.0
    %53 = vst [vmem:[#allocation2 + $0x8] sm:$0xff] 0.0
    %54 = vst [vmem:[#allocation2 + $0x10] sm:$0xff] 0.0
    %55 = vst [vmem:[#allocation2 + $0x18] sm:$0xff] 0.0
    %56 = vst [vmem:[#allocation2 + $0x20] sm:$0xff] 0.0
    %57 = vst [vmem:[#allocation2 + $0x28] sm:$0xff] 0.0
    %58 = vst [vmem:[#allocation2 + $0x30] sm:$0xff] 0.0
    %59 = vst [vmem:[#allocation2 + $0x38] sm:$0xff] 0.0
    %60 = vst [vmem:[#allocation2 + $0x40] sm:$0xff] 0.0
    %61 = vst [vmem:[#allocation2 + $0x48] sm:$0xff] 0.0
    %62 = vst [vmem:[#allocation2 + $0x50] sm:$0xff] 0.0
    %63 = vst [vmem:[#allocation2 + $0x58] sm:$0xff] 0.0
    %64 = vst [vmem:[#allocation2 + $0x60] sm:$0xff] 0.0
    %65 = vst [vmem:[#allocation2 + $0x68] sm:$0xff] 0.0
    %66 = vst [vmem:[#allocation2 + $0x70] sm:$0xff] 0.0
    %67 = vst [vmem:[#allocation2 + $0x78] sm:$0xff] 0.0
    %68 = vst [vmem:[#allocation2 + $0x80] sm:$0xff] 0.0
    %69 = vst [vmem:[#allocation2 + $0x88] sm:$0xff] 0.0
    %70 = vst [vmem:[#allocation2 + $0x90] sm:$0xff] 0.0
    %71 = vst [vmem:[#allocation2 + $0x98] sm:$0xff] 0.0
    %72 = vst [vmem:[#allocation2 + $0xa0] sm:$0xff] 0.0
    %73 = vst [vmem:[#allocation2 + $0xa8] sm:$0xff] 0.0
    %74 = vst [vmem:[#allocation2 + $0xb0] sm:$0xff] 0.0
    %75 = vst [vmem:[#allocation2 + $0xb8] sm:$0xff] 0.0
    %76 = vst [vmem:[#allocation2 + $0xc0] sm:$0xff] 0.0
    %77 = vst [vmem:[#allocation2 + $0xc8] sm:$0xff] 0.0
    %78 = vst [vmem:[#allocation2 + $0xd0] sm:$0xff] 0.0
    %79 = vst [vmem:[#allocation2 + $0xd8] sm:$0xff] 0.0
    %80 = vst [vmem:[#allocation2 + $0xe0] sm:$0xff] 0.0
    %81 = vst [vmem:[#allocation2 + $0xe8] sm:$0xff] 0.0
    %82 = vst [vmem:[#allocation2 + $0xf0] sm:$0xff] 0.0
    %83 = vst [vmem:[#allocation2 + $0xf8] sm:$0xff] 0.0
    %84 = vst [vmem:[#allocation2 + $0x100] sm:$0xff] 0.0
    %85 = vst [vmem:[#allocation2 + $0x108] sm:$0xff] 0.0
    %86 = vst [vmem:[#allocation2 + $0x110] sm:$0xff] 0.0
    %v87 = vld [vmem:[%s5] ss:$2 sm:$0x1f]
    %s88 = scalar_lea.vmem %s5, 1
    %v89 = vld [vmem:[%s88] ss:$2 sm:$0x1f]
    %v90 = vld [vmem:[#allocation3] sm:$0xff]
    %v92 = vcombine.high %v90, %v90
    %93 = vrot.lane.b32.xlu0 %v90, 16
    %v94 = vpop.permute.xlu0 %93
    %95 = vrot.lane.b32.xlu0 %v92, 16
    %v96 = vpop.permute.xlu0 %95
    %vm97 = vcmask 130048
    %v98 = vsel %vm97, %v94, %v96
    %vm102 = vcmask 1043584
    %103 = vst.msk [vmem:[#allocation2 + $0x8] sm:$0xf] %vm102, %v94
    %104 = vst [vmem:[#allocation2 + $0x10] sm:$0xf] %v98
    %vm105 = vcmask 125952
    %106 = vst.msk [vmem:[#allocation2 + $0x18] sm:$0xf] %vm105, %v96
    %v107 = vcombine.low %v90, %v90
    %109 = vst [vmem:[#allocation2 + $0x8] sm:$0xf0] %v107
    %110 = vst [vmem:[#allocation2 + $0x10] sm:$0xf0] %v90
    %111 = vrot.lane.b32.xlu0 %v90, 112
    %v112 = vpop.permute.xlu0 %111
    %113 = vrot.lane.b32.xlu0 %v92, 112
    %v114 = vpop.permute.xlu0 %113
    %vm115 = vcmask 916480
    %v116 = vsel %vm115, %v112, %v114
    %vm120 = vcmask 1044352
    %121 = vst.msk [vmem:[#allocation2 + $0x38] sm:$0xf] %vm120, %v112
    %122 = vst [vmem:[#allocation2 + $0x40] sm:$0xf] %v116
    %vm123 = vcmask 912384
    %124 = vst.msk [vmem:[#allocation2 + $0x48] sm:$0xf] %vm123, %v114
    %s125 = scalar_lea.vmem [#allocation3], 8
    %v126 = vld [vmem:[%s125] sm:$0xff]
    %v128 = vcombine.high %v126, %v126
    %129 = vrot.lane.b32.xlu0 %v126, 16
    %v130 = vpop.permute.xlu0 %129
    %131 = vrot.lane.b32.xlu0 %v128, 16
    %v132 = vpop.permute.xlu0 %131
    %v133 = vsel %vm97, %v130, %v132
    %137 = vst.msk [vmem:[#allocation2 + $0x20] sm:$0xf] %vm102, %v130
    %138 = vst [vmem:[#allocation2 + $0x28] sm:$0xf] %v133
    %139 = vst.msk [vmem:[#allocation2 + $0x30] sm:$0xf] %vm105, %v132
    %v140 = vcombine.low %v126, %v126
    %142 = vst [vmem:[#allocation2 + $0x20] sm:$0xf0] %v140
    %143 = vst [vmem:[#allocation2 + $0x28] sm:$0xf0] %v126
    %144 = vrot.lane.b32.xlu0 %v126, 112
    %v145 = vpop.permute.xlu0 %144
    %146 = vrot.lane.b32.xlu0 %v128, 112
    %v147 = vpop.permute.xlu0 %146
    %v148 = vsel %vm115, %v145, %v147
    %152 = vst.msk [vmem:[#allocation2 + $0x50] sm:$0xf] %vm120, %v145
    %153 = vst [vmem:[#allocation2 + $0x58] sm:$0xf] %v148
    %154 = vst.msk [vmem:[#allocation2 + $0x60] sm:$0xf] %vm123, %v147
    %v155 = vld [vmem:[%s2] sm:$0xff]
    %s156 = scalar_lea.vmem [#allocation6], 8
    %v157 = vld [vmem:[%s156] sm:$0xff]
    %v158 = vld [vmem:[#allocation2 + $0x8] sm:$0xff]
    %v159 = vld [vmem:[#allocation2 + $0x10] sm:$0xff]
    %v160 = vld [vmem:[#allocation2 + $0x18] sm:$0xff]
    %v161 = vld [vmem:[#allocation2 + $0x20] sm:$0xff]
    %v162 = vld [vmem:[#allocation2 + $0x28] sm:$0xff]
    %v163 = vld [vmem:[#allocation2 + $0x40] sm:$0xf]
    %v164 = vld [vmem:[#allocation2 + $0x48] sm:$0xf]
    %v165 = vld [vmem:[#allocation2 + $0x50] sm:$0xf]
    %v166 = vld [vmem:[#allocation2 + $0x58] sm:$0xf]
    %v167 = vld [vmem:[#allocation2 + $0x60] sm:$0xf]
    %vm168 = vcmask 97280
    %v170 = vsel %vm168, %v157, 0
    %vm172 = vcmask 1043456
    %v174 = vsel %vm172, %v163, 0
    %v177 = vsel %vm172, %v164, 0
    %v180 = vsel %vm172, %v165, 0
    %v183 = vsel %vm172, %v166, 0
    %v186 = vsel %vm172, %v167, 0
    %188 = vmatprep.subr.mxu0 %v159
    %189 = vmatpush1.msra.mxu0 %v158
    %190 = vmatprep.subr.mxu0 %v177
    %191 = vmatpush1.msra.mxu0 %v174
    %192 = vmatprep.subr.mxu0 0.0
    %193 = vmatpush1.msra.mxu0 0.0
    %194 = vmatprep.subr.mxu0 0.0
    %195 = vmatpush1.msra.mxu0 0.0
    %196 = vmatprep.subr.mxu0 0.0
    %197 = vmatpush1.msra.mxu0 0.0
    %198 = vmatprep.subr.mxu0 0.0
    %199 = vmatpush1.msra.mxu0 0.0
    %200 = vmatprep.subr.mxu0 0.0
    %201 = vmatpush1.msra.mxu0 0.0
    %202 = vmatprep.subr.mxu0 0.0
    %203 = vmatpush1.msra.mxu0 0.0
    %204 = vmatprep.subr.mxu0 0.0
    %205 = vmatpush1.msra.mxu0 0.0
    %206 = vmatprep.subr.mxu0 0.0
    %207 = vmatpush1.msra.mxu0 0.0
    %208 = vmatprep.subr.mxu0 0.0
    %209 = vmatpush1.msra.mxu0 0.0
    %210 = vmatprep.subr.mxu0 0.0
    %211 = vmatpush1.msra.mxu0 0.0
    %212 = vmatprep.subr.mxu0 0.0
    %213 = vmatpush1.msra.mxu0 0.0
    %214 = vmatprep.subr.mxu0 0.0
    %215 = vmatpush1.msra.mxu0 0.0
    %216 = vmatprep.subr.mxu0 0.0
    %217 = vmatpush1.msra.mxu0 0.0
    %218 = vmatprep.subr.mxu0 0.0
    %219 = vmatpush1.msra.mxu0 0.0
    %220 = vmatprep.subr.mxu0 0.0
    %221 = vmatpush1.msra.mxu0 0.0
    %222 = vmatprep.subr.mxu0 0.0
    %223 = vmatpush1.msra.mxu0 0.0
    %224 = vmatprep.subr.mxu0 0.0
    %225 = vmatpush1.msra.mxu0 0.0
    %226 = vmatprep.subr.mxu0 0.0
    %227 = vmatpush1.msra.mxu0 0.0
    %228 = vmatprep.subr.mxu0 0.0
    %229 = vmatpush1.msra.mxu0 0.0
    %230 = vmatprep.subr.mxu0 0.0
    %231 = vmatpush1.msra.mxu0 0.0
    %232 = vmatprep.subr.mxu0 0.0
    %233 = vmatpush1.msra.mxu0 0.0
    %234 = vmatprep.subr.mxu0 0.0
    %235 = vmatpush1.msra.mxu0 0.0
    %236 = vmatprep.subr.mxu0 0.0
    %237 = vmatpush1.msra.mxu0 0.0
    %238 = vmatprep.subr.mxu0 0.0
    %239 = vmatpush1.msra.mxu0 0.0
    %240 = vmatprep.subr.mxu0 0.0
    %241 = vmatpush1.msra.mxu0 0.0
    %242 = vmatprep.subr.mxu0 0.0
    %243 = vmatpush1.msra.mxu0 0.0
    %244 = vmatprep.subr.mxu0 0.0
    %245 = vmatpush1.msra.mxu0 0.0
    %246 = vmatprep.subr.mxu0 0.0
    %247 = vmatpush1.msra.mxu0 0.0
    %248 = vmatprep.subr.mxu0 0.0
    %249 = vmatpush1.msra.mxu0 0.0
    %250 = vmatprep.subr.mxu0 0.0
    %251 = vmatpush1.msra.mxu0 0.0
    %252 = vmatprep.mubr.f32.mxu0 0.0
    %253 = vmatmul.mubr.f32.gmra.mrb[0].mxu0 %v170
    %v254 = vpop.f32.mrb[0].mxu0
    %v255 = vadd.f32 0.0, %v254
    %v256 = vpop.f32.mrb[0].mxu0
    %v257 = vadd.f32 0.0, %v256
    %258 = vdwg.mxu0
    %259 = vmatprep.subr.mxu0 %v161
    %260 = vmatpush1.msra.mxu0 %v160
    %261 = vmatprep.subr.mxu0 %v183
    %262 = vmatpush1.msra.mxu0 %v180
    %263 = vmatprep.subr.mxu0 0.0
    %264 = vmatpush1.msra.mxu0 0.0
    %265 = vmatprep.subr.mxu0 0.0
    %266 = vmatpush1.msra.mxu0 0.0
    %267 = vmatprep.subr.mxu0 0.0
    %268 = vmatpush1.msra.mxu0 0.0
    %269 = vmatprep.subr.mxu0 0.0
    %270 = vmatpush1.msra.mxu0 0.0
    %271 = vmatprep.subr.mxu0 0.0
    %272 = vmatpush1.msra.mxu0 0.0
    %273 = vmatprep.subr.mxu0 0.0
    %274 = vmatpush1.msra.mxu0 0.0
    %275 = vmatprep.subr.mxu0 0.0
    %276 = vmatpush1.msra.mxu0 0.0
    %277 = vmatprep.subr.mxu0 0.0
    %278 = vmatpush1.msra.mxu0 0.0
    %279 = vmatprep.subr.mxu0 0.0
    %280 = vmatpush1.msra.mxu0 0.0
    %281 = vmatprep.subr.mxu0 0.0
    %282 = vmatpush1.msra.mxu0 0.0
    %283 = vmatprep.subr.mxu0 0.0
    %284 = vmatpush1.msra.mxu0 0.0
    %285 = vmatprep.subr.mxu0 0.0
    %286 = vmatpush1.msra.mxu0 0.0
    %287 = vmatprep.subr.mxu0 0.0
    %288 = vmatpush1.msra.mxu0 0.0
    %289 = vmatprep.subr.mxu0 0.0
    %290 = vmatpush1.msra.mxu0 0.0
    %291 = vmatprep.subr.mxu0 0.0
    %292 = vmatpush1.msra.mxu0 0.0
    %293 = vmatprep.subr.mxu0 0.0
    %294 = vmatpush1.msra.mxu0 0.0
    %295 = vmatprep.subr.mxu0 0.0
    %296 = vmatpush1.msra.mxu0 0.0
    %297 = vmatprep.subr.mxu0 0.0
    %298 = vmatpush1.msra.mxu0 0.0
    %299 = vmatprep.subr.mxu0 0.0
    %300 = vmatpush1.msra.mxu0 0.0
    %301 = vmatprep.subr.mxu0 0.0
    %302 = vmatpush1.msra.mxu0 0.0
    %303 = vmatprep.subr.mxu0 0.0
    %304 = vmatpush1.msra.mxu0 0.0
    %305 = vmatprep.subr.mxu0 0.0
    %306 = vmatpush1.msra.mxu0 0.0
    %307 = vmatprep.subr.mxu0 0.0
    %308 = vmatpush1.msra.mxu0 0.0
    %309 = vmatprep.subr.mxu0 0.0
    %310 = vmatpush1.msra.mxu0 0.0
    %311 = vmatprep.subr.mxu0 0.0
    %312 = vmatpush1.msra.mxu0 0.0
    %313 = vmatprep.subr.mxu0 0.0
    %314 = vmatpush1.msra.mxu0 0.0
    %315 = vmatprep.subr.mxu0 0.0
    %316 = vmatpush1.msra.mxu0 0.0
    %317 = vmatprep.subr.mxu0 0.0
    %318 = vmatpush1.msra.mxu0 0.0
    %319 = vmatprep.subr.mxu0 0.0
    %320 = vmatpush1.msra.mxu0 0.0
    %321 = vmatprep.subr.mxu0 0.0
    %322 = vmatpush1.msra.mxu0 0.0
    %323 = vmatprep.mubr.f32.mxu0 0.0
    %324 = vmatmul.mubr.f32.gmra.mrb[0].mxu0 %v170
    %v325 = vpop.f32.mrb[0].mxu0
    %v326 = vpop.f32.mrb[0].mxu0
    %v327 = vadd.f32 0.0, %v326
    %328 = vdwg.mxu0
    %329 = vmatprep.subr.mxu0 0.0
    %330 = vmatpush1.msra.mxu0 %v162
    %331 = vmatprep.subr.mxu0 0.0
    %332 = vmatpush1.msra.mxu0 %v186
    %333 = vmatprep.subr.mxu0 0.0
    %334 = vmatpush1.msra.mxu0 0.0
    %335 = vmatprep.subr.mxu0 0.0
    %336 = vmatpush1.msra.mxu0 0.0
    %337 = vmatprep.subr.mxu0 0.0
    %338 = vmatpush1.msra.mxu0 0.0
    %339 = vmatprep.subr.mxu0 0.0
    %340 = vmatpush1.msra.mxu0 0.0
    %341 = vmatprep.subr.mxu0 0.0
    %342 = vmatpush1.msra.mxu0 0.0
    %343 = vmatprep.subr.mxu0 0.0
    %344 = vmatpush1.msra.mxu0 0.0
    %345 = vmatprep.subr.mxu0 0.0
    %346 = vmatpush1.msra.mxu0 0.0
    %347 = vmatprep.subr.mxu0 0.0
    %348 = vmatpush1.msra.mxu0 0.0
    %349 = vmatprep.subr.mxu0 0.0
    %350 = vmatpush1.msra.mxu0 0.0
    %351 = vmatprep.subr.mxu0 0.0
    %352 = vmatpush1.msra.mxu0 0.0
    %353 = vmatprep.subr.mxu0 0.0
    %354 = vmatpush1.msra.mxu0 0.0
    %355 = vmatprep.subr.mxu0 0.0
    %356 = vmatpush1.msra.mxu0 0.0
    %357 = vmatprep.subr.mxu0 0.0
    %358 = vmatpush1.msra.mxu0 0.0
    %359 = vmatprep.subr.mxu0 0.0
    %360 = vmatpush1.msra.mxu0 0.0
    %361 = vmatprep.subr.mxu0 0.0
    %362 = vmatpush1.msra.mxu0 0.0
    %363 = vmatprep.subr.mxu0 0.0
    %364 = vmatpush1.msra.mxu0 0.0
    %365 = vmatprep.subr.mxu0 0.0
    %366 = vmatpush1.msra.mxu0 0.0
    %367 = vmatprep.subr.mxu0 0.0
    %368 = vmatpush1.msra.mxu0 0.0
    %369 = vmatprep.subr.mxu0 0.0
    %370 = vmatpush1.msra.mxu0 0.0
    %371 = vmatprep.subr.mxu0 0.0
    %372 = vmatpush1.msra.mxu0 0.0
    %373 = vmatprep.subr.mxu0 0.0
    %374 = vmatpush1.msra.mxu0 0.0
    %375 = vmatprep.subr.mxu0 0.0
    %376 = vmatpush1.msra.mxu0 0.0
    %377 = vmatprep.subr.mxu0 0.0
    %378 = vmatpush1.msra.mxu0 0.0
    %379 = vmatprep.subr.mxu0 0.0
    %380 = vmatpush1.msra.mxu0 0.0
    %381 = vmatprep.subr.mxu0 0.0
    %382 = vmatpush1.msra.mxu0 0.0
    %383 = vmatprep.subr.mxu0 0.0
    %384 = vmatpush1.msra.mxu0 0.0
    %385 = vmatprep.subr.mxu0 0.0
    %386 = vmatpush1.msra.mxu0 0.0
    %387 = vmatprep.subr.mxu0 0.0
    %388 = vmatpush1.msra.mxu0 0.0
    %389 = vmatprep.subr.mxu0 0.0
    %390 = vmatpush1.msra.mxu0 0.0
    %391 = vmatprep.subr.mxu0 0.0
    %392 = vmatpush1.msra.mxu0 0.0
    %393 = vmatprep.mubr.f32.mxu0 0.0
    %394 = vmatmul.mubr.f32.gmra.mrb[0].mxu0 %v170
    %v395 = vpop.f32.mrb[0].mxu0
    %v396 = vadd.f32 0.0, %v395
    %v397 = vpop.f32.mrb[0].mxu0
    %398 = vdwg.mxu0
    %400 = vset.pattern.permute.xlu0 0
    %401 = vperm.xlu0 %400, %v155
    %v402 = vpop.permute.xlu0 %401
    %v404 = vadd.f32 %v402, %v255
    %v405 = vadd.f32 %v402, %v257
    %v406 = vadd.f32 %v402, %v327
    %v407 = vadd.f32 %v402, %v396
    %v408 = vld [vmem:[#allocation6] sm:$0xff]
    %v409 = vld [vmem:[#allocation2] sm:$0xff]
    %v410 = vld [vmem:[#allocation2 + $0x38] sm:$0xf]
    %418 = vrot.lane.b32.xlu0 %v409, 1
    %v419 = vpop.permute.xlu0 %418
    %420 = vrot.lane.b32.xlu0 %v158, 1
    %v421 = vpop.permute.xlu0 %420
    %422 = vrot.lane.b32.xlu0 %v159, 1
    %v423 = vpop.permute.xlu0 %422
    %424 = vrot.lane.b32.xlu0 %v160, 1
    %v425 = vpop.permute.xlu0 %424
    %426 = vrot.lane.b32.xlu0 %v161, 1
    %v427 = vpop.permute.xlu0 %426
    %428 = vrot.lane.b32.xlu0 %v162, 1
    %v429 = vpop.permute.xlu0 %428
    %430 = vrot.lane.b32.xlu0 %v410, 1
    %v431 = vpop.permute.xlu0 %430
    %432 = vrot.lane.b32.xlu0 %v163, 1
    %v433 = vpop.permute.xlu0 %432
    %434 = vrot.lane.b32.xlu0 %v164, 1
    %v435 = vpop.permute.xlu0 %434
    %436 = vrot.lane.b32.xlu0 %v165, 1
    %v437 = vpop.permute.xlu0 %436
    %438 = vrot.lane.b32.xlu0 %v166, 1
    %v439 = vpop.permute.xlu0 %438
    %440 = vrot.lane.b32.xlu0 %v167, 1
    %v441 = vpop.permute.xlu0 %440
    %vm442 = vcmask 7168
    %v443 = vsel %vm442, %v419, %v421
    %v444 = vsel %vm442, %v421, %v423
    %v445 = vsel %vm442, %v423, %v425
    %v446 = vsel %vm442, %v425, %v427
    %v447 = vsel %vm442, %v427, %v429
    %v448 = vsel %vm442, %v431, %v433
    %v449 = vsel %vm442, %v433, %v435
    %v450 = vsel %vm442, %v435, %v437
    %v451 = vsel %vm442, %v437, %v439
    %v452 = vsel %vm442, %v439, %v441
    %v459 = vsel %vm168, %v408, 0
    %v461 = vsel %vm172, %v448, 0
    %v463 = vsel %vm172, %v449, 0
    %v465 = vsel %vm172, %v450, 0
    %v467 = vsel %vm172, %v451, 0
    %v469 = vsel %vm172, %v452, 0
    %471 = vmatprep.subr.mxu0 %v444
    %472 = vmatpush1.msra.mxu0 %v443
    %473 = vmatprep.subr.mxu0 %v463
    %474 = vmatpush1.msra.mxu0 %v461
    %475 = vmatprep.subr.mxu0 0.0
    %476 = vmatpush1.msra.mxu0 0.0
    %477 = vmatprep.subr.mxu0 0.0
    %478 = vmatpush1.msra.mxu0 0.0
    %479 = vmatprep.subr.mxu0 0.0
    %480 = vmatpush1.msra.mxu0 0.0
    %481 = vmatprep.subr.mxu0 0.0
    %482 = vmatpush1.msra.mxu0 0.0
    %483 = vmatprep.subr.mxu0 0.0
    %484 = vmatpush1.msra.mxu0 0.0
    %485 = vmatprep.subr.mxu0 0.0
    %486 = vmatpush1.msra.mxu0 0.0
    %487 = vmatprep.subr.mxu0 0.0
    %488 = vmatpush1.msra.mxu0 0.0
    %489 = vmatprep.subr.mxu0 0.0
    %490 = vmatpush1.msra.mxu0 0.0
    %491 = vmatprep.subr.mxu0 0.0
    %492 = vmatpush1.msra.mxu0 0.0
    %493 = vmatprep.subr.mxu0 0.0
    %494 = vmatpush1.msra.mxu0 0.0
    %495 = vmatprep.subr.mxu0 0.0
    %496 = vmatpush1.msra.mxu0 0.0
    %497 = vmatprep.subr.mxu0 0.0
    %498 = vmatpush1.msra.mxu0 0.0
    %499 = vmatprep.subr.mxu0 0.0
    %500 = vmatpush1.msra.mxu0 0.0
    %501 = vmatprep.subr.mxu0 0.0
    %502 = vmatpush1.msra.mxu0 0.0
    %503 = vmatprep.subr.mxu0 0.0
    %504 = vmatpush1.msra.mxu0 0.0
    %505 = vmatprep.subr.mxu0 0.0
    %506 = vmatpush1.msra.mxu0 0.0
    %507 = vmatprep.subr.mxu0 0.0
    %508 = vmatpush1.msra.mxu0 0.0
    %509 = vmatprep.subr.mxu0 0.0
    %510 = vmatpush1.msra.mxu0 0.0
    %511 = vmatprep.subr.mxu0 0.0
    %512 = vmatpush1.msra.mxu0 0.0
    %513 = vmatprep.subr.mxu0 0.0
    %514 = vmatpush1.msra.mxu0 0.0
    %515 = vmatprep.subr.mxu0 0.0
    %516 = vmatpush1.msra.mxu0 0.0
    %517 = vmatprep.subr.mxu0 0.0
    %518 = vmatpush1.msra.mxu0 0.0
    %519 = vmatprep.subr.mxu0 0.0
    %520 = vmatpush1.msra.mxu0 0.0
    %521 = vmatprep.subr.mxu0 0.0
    %522 = vmatpush1.msra.mxu0 0.0
    %523 = vmatprep.subr.mxu0 0.0
    %524 = vmatpush1.msra.mxu0 0.0
    %525 = vmatprep.subr.mxu0 0.0
    %526 = vmatpush1.msra.mxu0 0.0
    %527 = vmatprep.subr.mxu0 0.0
    %528 = vmatpush1.msra.mxu0 0.0
    %529 = vmatprep.subr.mxu0 0.0
    %530 = vmatpush1.msra.mxu0 0.0
    %531 = vmatprep.subr.mxu0 0.0
    %532 = vmatpush1.msra.mxu0 0.0
    %533 = vmatprep.subr.mxu0 0.0
    %534 = vmatpush1.msra.mxu0 0.0
    %535 = vmatprep.mubr.f32.mxu0 0.0
    %536 = vmatmul.mubr.f32.gmra.mrb[0].mxu0 %v459
    %v537 = vpop.f32.mrb[0].mxu0
    %v538 = vadd.f32 0.0, %v537
    %v539 = vpop.f32.mrb[0].mxu0
    %v540 = vadd.f32 0.0, %v539
    %541 = vdwg.mxu0
    %542 = vmatprep.subr.mxu0 %v446
    %543 = vmatpush1.msra.mxu0 %v445
    %544 = vmatprep.subr.mxu0 %v467
    %545 = vmatpush1.msra.mxu0 %v465
    %546 = vmatprep.subr.mxu0 0.0
    %547 = vmatpush1.msra.mxu0 0.0
    %548 = vmatprep.subr.mxu0 0.0
    %549 = vmatpush1.msra.mxu0 0.0
    %550 = vmatprep.subr.mxu0 0.0
    %551 = vmatpush1.msra.mxu0 0.0
    %552 = vmatprep.subr.mxu0 0.0
    %553 = vmatpush1.msra.mxu0 0.0
    %554 = vmatprep.subr.mxu0 0.0
    %555 = vmatpush1.msra.mxu0 0.0
    %556 = vmatprep.subr.mxu0 0.0
    %557 = vmatpush1.msra.mxu0 0.0
    %558 = vmatprep.subr.mxu0 0.0
    %559 = vmatpush1.msra.mxu0 0.0
    %560 = vmatprep.subr.mxu0 0.0
    %561 = vmatpush1.msra.mxu0 0.0
    %562 = vmatprep.subr.mxu0 0.0
    %563 = vmatpush1.msra.mxu0 0.0
    %564 = vmatprep.subr.mxu0 0.0
    %565 = vmatpush1.msra.mxu0 0.0
    %566 = vmatprep.subr.mxu0 0.0
    %567 = vmatpush1.msra.mxu0 0.0
    %568 = vmatprep.subr.mxu0 0.0
    %569 = vmatpush1.msra.mxu0 0.0
    %570 = vmatprep.subr.mxu0 0.0
    %571 = vmatpush1.msra.mxu0 0.0
    %572 = vmatprep.subr.mxu0 0.0
    %573 = vmatpush1.msra.mxu0 0.0
    %574 = vmatprep.subr.mxu0 0.0
    %575 = vmatpush1.msra.mxu0 0.0
    %576 = vmatprep.subr.mxu0 0.0
    %577 = vmatpush1.msra.mxu0 0.0
    %578 = vmatprep.subr.mxu0 0.0
    %579 = vmatpush1.msra.mxu0 0.0
    %580 = vmatprep.subr.mxu0 0.0
    %581 = vmatpush1.msra.mxu0 0.0
    %582 = vmatprep.subr.mxu0 0.0
    %583 = vmatpush1.msra.mxu0 0.0
    %584 = vmatprep.subr.mxu0 0.0
    %585 = vmatpush1.msra.mxu0 0.0
    %586 = vmatprep.subr.mxu0 0.0
    %587 = vmatpush1.msra.mxu0 0.0
    %588 = vmatprep.subr.mxu0 0.0
    %589 = vmatpush1.msra.mxu0 0.0
    %590 = vmatprep.subr.mxu0 0.0
    %591 = vmatpush1.msra.mxu0 0.0
    %592 = vmatprep.subr.mxu0 0.0
    %593 = vmatpush1.msra.mxu0 0.0
    %594 = vmatprep.subr.mxu0 0.0
    %595 = vmatpush1.msra.mxu0 0.0
    %596 = vmatprep.subr.mxu0 0.0
    %597 = vmatpush1.msra.mxu0 0.0
    %598 = vmatprep.subr.mxu0 0.0
    %599 = vmatpush1.msra.mxu0 0.0
    %600 = vmatprep.subr.mxu0 0.0
    %601 = vmatpush1.msra.mxu0 0.0
    %602 = vmatprep.subr.mxu0 0.0
    %603 = vmatpush1.msra.mxu0 0.0
    %604 = vmatprep.subr.mxu0 0.0
    %605 = vmatpush1.msra.mxu0 0.0
    %606 = vmatprep.mubr.f32.mxu0 0.0
    %607 = vmatmul.mubr.f32.gmra.mrb[0].mxu0 %v459
    %v608 = vpop.f32.mrb[0].mxu0
    %v609 = vpop.f32.mrb[0].mxu0
    %v610 = vadd.f32 0.0, %v609
    %611 = vdwg.mxu0
    %612 = vmatprep.subr.mxu0 0.0
    %613 = vmatpush1.msra.mxu0 %v447
    %614 = vmatprep.subr.mxu0 0.0
    %615 = vmatpush1.msra.mxu0 %v469
    %616 = vmatprep.subr.mxu0 0.0
    %617 = vmatpush1.msra.mxu0 0.0
    %618 = vmatprep.subr.mxu0 0.0
    %619 = vmatpush1.msra.mxu0 0.0
    %620 = vmatprep.subr.mxu0 0.0
    %621 = vmatpush1.msra.mxu0 0.0
    %622 = vmatprep.subr.mxu0 0.0
    %623 = vmatpush1.msra.mxu0 0.0
    %624 = vmatprep.subr.mxu0 0.0
    %625 = vmatpush1.msra.mxu0 0.0
    %626 = vmatprep.subr.mxu0 0.0
    %627 = vmatpush1.msra.mxu0 0.0
    %628 = vmatprep.subr.mxu0 0.0
    %629 = vmatpush1.msra.mxu0 0.0
    %630 = vmatprep.subr.mxu0 0.0
    %631 = vmatpush1.msra.mxu0 0.0
    %632 = vmatprep.subr.mxu0 0.0
    %633 = vmatpush1.msra.mxu0 0.0
    %634 = vmatprep.subr.mxu0 0.0
    %635 = vmatpush1.msra.mxu0 0.0
    %636 = vmatprep.subr.mxu0 0.0
    %637 = vmatpush1.msra.mxu0 0.0
    %638 = vmatprep.subr.mxu0 0.0
    %639 = vmatpush1.msra.mxu0 0.0
    %640 = vmatprep.subr.mxu0 0.0
    %641 = vmatpush1.msra.mxu0 0.0
    %642 = vmatprep.subr.mxu0 0.0
    %643 = vmatpush1.msra.mxu0 0.0
    %644 = vmatprep.subr.mxu0 0.0
    %645 = vmatpush1.msra.mxu0 0.0
    %646 = vmatprep.subr.mxu0 0.0
    %647 = vmatpush1.msra.mxu0 0.0
    %648 = vmatprep.subr.mxu0 0.0
    %649 = vmatpush1.msra.mxu0 0.0
    %650 = vmatprep.subr.mxu0 0.0
    %651 = vmatpush1.msra.mxu0 0.0
    %652 = vmatprep.subr.mxu0 0.0
    %653 = vmatpush1.msra.mxu0 0.0
    %654 = vmatprep.subr.mxu0 0.0
    %655 = vmatpush1.msra.mxu0 0.0
    %656 = vmatprep.subr.mxu0 0.0
    %657 = vmatpush1.msra.mxu0 0.0
    %658 = vmatprep.subr.mxu0 0.0
    %659 = vmatpush1.msra.mxu0 0.0
    %660 = vmatprep.subr.mxu0 0.0
    %661 = vmatpush1.msra.mxu0 0.0
    %662 = vmatprep.subr.mxu0 0.0
    %663 = vmatpush1.msra.mxu0 0.0
    %664 = vmatprep.subr.mxu0 0.0
    %665 = vmatpush1.msra.mxu0 0.0
    %666 = vmatprep.subr.mxu0 0.0
    %667 = vmatpush1.msra.mxu0 0.0
    %668 = vmatprep.subr.mxu0 0.0
    %669 = vmatpush1.msra.mxu0 0.0
    %670 = vmatprep.subr.mxu0 0.0
    %671 = vmatpush1.msra.mxu0 0.0
    %672 = vmatprep.subr.mxu0 0.0
    %673 = vmatpush1.msra.mxu0 0.0
    %674 = vmatprep.subr.mxu0 0.0
    %675 = vmatpush1.msra.mxu0 0.0
    %676 = vmatprep.mubr.f32.mxu0 0.0
    %677 = vmatmul.mubr.f32.gmra.mrb[0].mxu0 %v459
    %v678 = vpop.f32.mrb[0].mxu0
    %v679 = vadd.f32 0.0, %v678
    %v680 = vpop.f32.mrb[0].mxu0
    %681 = vdwg.mxu0
    %v683 = vlaneseq
    %v684 = vshrl.u32 %v683, 7
    %v685 = vsub.s32 0, %v684
    %v686 = vrot.slane %v87, %v685
    %v687 = vlaneseq
    %v688 = vshrl.u32 %v687, 7
    %v689 = vsub.s32 1, %v688
    %v690 = vrot.slane %v87, %v689
    %v691 = vlaneseq
    %v692 = vshrl.u32 %v691, 7
    %v693 = vsub.s32 3, %v692
    %v694 = vrot.slane %v87, %v693
    %v695 = vlaneseq
    %v696 = vshrl.u32 %v695, 7
    %v697 = vsub.s32 4, %v696
    %v698 = vrot.slane %v87, %v697
    %v703 = vmul.f32 %v686, %v538
    %v704 = vmul.f32 %v690, %v540
    %v705 = vmul.f32 %v694, %v610
    %v706 = vmul.f32 %v698, %v679
    %v707 = vadd.f32 %v404, %v703
    %v708 = vadd.f32 %v405, %v704
    %v709 = vadd.f32 %v406, %v705
    %v710 = vadd.f32 %v407, %v706
    %s711 = scalar_lea.vmem [#allocation6], 16
    %v712 = vld [vmem:[%s711] sm:$0xff]
    %v713 = vld [vmem:[#allocation2 + $0x8] sm:$0xff]
    %v714 = vld [vmem:[#allocation2 + $0x10] sm:$0xff]
    %v715 = vld [vmem:[#allocation2 + $0x18] sm:$0xff]
    %v716 = vld [vmem:[#allocation2 + $0x20] sm:$0xff]
    %v717 = vld [vmem:[#allocation2 + $0x28] sm:$0xff]
    %v718 = vld [vmem:[#allocation2 + $0x30] sm:$0xff]
    %v719 = vld [vmem:[#allocation2 + $0x40] sm:$0xf]
    %v720 = vld [vmem:[#allocation2 + $0x48] sm:$0xf]
    %v721 = vld [vmem:[#allocation2 + $0x50] sm:$0xf]
    %v722 = vld [vmem:[#allocation2 + $0x58] sm:$0xf]
    %v723 = vld [vmem:[#allocation2 + $0x60] sm:$0xf]
    %v724 = vld [vmem:[#allocation2 + $0x68] sm:$0xf]
    %737 = vrot.lane.b32.xlu0 %v713, 127
    %v738 = vpop.permute.xlu0 %737
    %739 = vrot.lane.b32.xlu0 %v714, 127
    %v740 = vpop.permute.xlu0 %739
    %741 = vrot.lane.b32.xlu0 %v715, 127
    %v742 = vpop.permute.xlu0 %741
    %743 = vrot.lane.b32.xlu0 %v716, 127
    %v744 = vpop.permute.xlu0 %743
    %745 = vrot.lane.b32.xlu0 %v717, 127
    %v746 = vpop.permute.xlu0 %745
    %747 = vrot.lane.b32.xlu0 %v718, 127
    %v748 = vpop.permute.xlu0 %747
    %749 = vrot.lane.b32.xlu0 %v719, 127
    %v750 = vpop.permute.xlu0 %749
    %751 = vrot.lane.b32.xlu0 %v720, 127
    %v752 = vpop.permute.xlu0 %751
    %753 = vrot.lane.b32.xlu0 %v721, 127
    %v754 = vpop.permute.xlu0 %753
    %755 = vrot.lane.b32.xlu0 %v722, 127
    %v756 = vpop.permute.xlu0 %755
    %757 = vrot.lane.b32.xlu0 %v723, 127
    %v758 = vpop.permute.xlu0 %757
    %759 = vrot.lane.b32.xlu0 %v724, 127
    %v760 = vpop.permute.xlu0 %759
    %vm761 = vcmask 1039360
    %v762 = vsel %vm761, %v738, %v740
    %v763 = vsel %vm761, %v740, %v742
    %v764 = vsel %vm761, %v742, %v744
    %v765 = vsel %vm761, %v744, %v746
    %v766 = vsel %vm761, %v746, %v748
    %v767 = vsel %vm761, %v750, %v752
    %v768 = vsel %vm761, %v752, %v754
    %v769 = vsel %vm761, %v754, %v756
    %v770 = vsel %vm761, %v756, %v758
    %v771 = vsel %vm761, %v758, %v760
    %v778 = vsel %vm168, %v712, 0
    %v780 = vsel %vm172, %v767, 0
    %v782 = vsel %vm172, %v768, 0
    %v784 = vsel %vm172, %v769, 0
    %v786 = vsel %vm172, %v770, 0
    %v788 = vsel %vm172, %v771, 0
    %790 = vmatprep.subr.mxu0 %v763
    %791 = vmatpush1.msra.mxu0 %v762
    %792 = vmatprep.subr.mxu0 %v782
    %793 = vmatpush1.msra.mxu0 %v780
    %794 = vmatprep.subr.mxu0 0.0
    %795 = vmatpush1.msra.mxu0 0.0
    %796 = vmatprep.subr.mxu0 0.0
    %797 = vmatpush1.msra.mxu0 0.0
    %798 = vmatprep.subr.mxu0 0.0
    %799 = vmatpush1.msra.mxu0 0.0
    %800 = vmatprep.subr.mxu0 0.0
    %801 = vmatpush1.msra.mxu0 0.0
    %802 = vmatprep.subr.mxu0 0.0
    %803 = vmatpush1.msra.mxu0 0.0
    %804 = vmatprep.subr.mxu0 0.0
    %805 = vmatpush1.msra.mxu0 0.0
    %806 = vmatprep.subr.mxu0 0.0
    %807 = vmatpush1.msra.mxu0 0.0
    %808 = vmatprep.subr.mxu0 0.0
    %809 = vmatpush1.msra.mxu0 0.0
    %810 = vmatprep.subr.mxu0 0.0
    %811 = vmatpush1.msra.mxu0 0.0
    %812 = vmatprep.subr.mxu0 0.0
    %813 = vmatpush1.msra.mxu0 0.0
    %814 = vmatprep.subr.mxu0 0.0
    %815 = vmatpush1.msra.mxu0 0.0
    %816 = vmatprep.subr.mxu0 0.0
    %817 = vmatpush1.msra.mxu0 0.0
    %818 = vmatprep.subr.mxu0 0.0
    %819 = vmatpush1.msra.mxu0 0.0
    %820 = vmatprep.subr.mxu0 0.0
    %821 = vmatpush1.msra.mxu0 0.0
    %822 = vmatprep.subr.mxu0 0.0
    %823 = vmatpush1.msra.mxu0 0.0
    %824 = vmatprep.subr.mxu0 0.0
    %825 = vmatpush1.msra.mxu0 0.0
    %826 = vmatprep.subr.mxu0 0.0
    %827 = vmatpush1.msra.mxu0 0.0
    %828 = vmatprep.subr.mxu0 0.0
    %829 = vmatpush1.msra.mxu0 0.0
    %830 = vmatprep.subr.mxu0 0.0
    %831 = vmatpush1.msra.mxu0 0.0
    %832 = vmatprep.subr.mxu0 0.0
    %833 = vmatpush1.msra.mxu0 0.0
    %834 = vmatprep.subr.mxu0 0.0
    %835 = vmatpush1.msra.mxu0 0.0
    %836 = vmatprep.subr.mxu0 0.0
    %837 = vmatpush1.msra.mxu0 0.0
    %838 = vmatprep.subr.mxu0 0.0
    %839 = vmatpush1.msra.mxu0 0.0
    %840 = vmatprep.subr.mxu0 0.0
    %841 = vmatpush1.msra.mxu0 0.0
    %842 = vmatprep.subr.mxu0 0.0
    %843 = vmatpush1.msra.mxu0 0.0
    %844 = vmatprep.subr.mxu0 0.0
    %845 = vmatpush1.msra.mxu0 0.0
    %846 = vmatprep.subr.mxu0 0.0
    %847 = vmatpush1.msra.mxu0 0.0
    %848 = vmatprep.subr.mxu0 0.0
    %849 = vmatpush1.msra.mxu0 0.0
    %850 = vmatprep.subr.mxu0 0.0
    %851 = vmatpush1.msra.mxu0 0.0
    %852 = vmatprep.subr.mxu0 0.0
    %853 = vmatpush1.msra.mxu0 0.0
    %854 = vmatprep.mubr.f32.mxu0 0.0
    %855 = vmatmul.mubr.f32.gmra.mrb[0].mxu0 %v778
    %v856 = vpop.f32.mrb[0].mxu0
    %v857 = vadd.f32 0.0, %v856
    %v858 = vpop.f32.mrb[0].mxu0
    %v859 = vadd.f32 0.0, %v858
    %860 = vdwg.mxu0
    %861 = vmatprep.subr.mxu0 %v765
    %862 = vmatpush1.msra.mxu0 %v764
    %863 = vmatprep.subr.mxu0 %v786
    %864 = vmatpush1.msra.mxu0 %v784
    %865 = vmatprep.subr.mxu0 0.0
    %866 = vmatpush1.msra.mxu0 0.0
    %867 = vmatprep.subr.mxu0 0.0
    %868 = vmatpush1.msra.mxu0 0.0
    %869 = vmatprep.subr.mxu0 0.0
    %870 = vmatpush1.msra.mxu0 0.0
    %871 = vmatprep.subr.mxu0 0.0
    %872 = vmatpush1.msra.mxu0 0.0
    %873 = vmatprep.subr.mxu0 0.0
    %874 = vmatpush1.msra.mxu0 0.0
    %875 = vmatprep.subr.mxu0 0.0
    %876 = vmatpush1.msra.mxu0 0.0
    %877 = vmatprep.subr.mxu0 0.0
    %878 = vmatpush1.msra.mxu0 0.0
    %879 = vmatprep.subr.mxu0 0.0
    %880 = vmatpush1.msra.mxu0 0.0
    %881 = vmatprep.subr.mxu0 0.0
    %882 = vmatpush1.msra.mxu0 0.0
    %883 = vmatprep.subr.mxu0 0.0
    %884 = vmatpush1.msra.mxu0 0.0
    %885 = vmatprep.subr.mxu0 0.0
    %886 = vmatpush1.msra.mxu0 0.0
    %887 = vmatprep.subr.mxu0 0.0
    %888 = vmatpush1.msra.mxu0 0.0
    %889 = vmatprep.subr.mxu0 0.0
    %890 = vmatpush1.msra.mxu0 0.0
    %891 = vmatprep.subr.mxu0 0.0
    %892 = vmatpush1.msra.mxu0 0.0
    %893 = vmatprep.subr.mxu0 0.0
    %894 = vmatpush1.msra.mxu0 0.0
    %895 = vmatprep.subr.mxu0 0.0
    %896 = vmatpush1.msra.mxu0 0.0
    %897 = vmatprep.subr.mxu0 0.0
    %898 = vmatpush1.msra.mxu0 0.0
    %899 = vmatprep.subr.mxu0 0.0
    %900 = vmatpush1.msra.mxu0 0.0
    %901 = vmatprep.subr.mxu0 0.0
    %902 = vmatpush1.msra.mxu0 0.0
    %903 = vmatprep.subr.mxu0 0.0
    %904 = vmatpush1.msra.mxu0 0.0
    %905 = vmatprep.subr.mxu0 0.0
    %906 = vmatpush1.msra.mxu0 0.0
    %907 = vmatprep.subr.mxu0 0.0
    %908 = vmatpush1.msra.mxu0 0.0
    %909 = vmatprep.subr.mxu0 0.0
    %910 = vmatpush1.msra.mxu0 0.0
    %911 = vmatprep.subr.mxu0 0.0
    %912 = vmatpush1.msra.mxu0 0.0
    %913 = vmatprep.subr.mxu0 0.0
    %914 = vmatpush1.msra.mxu0 0.0
    %915 = vmatprep.subr.mxu0 0.0
    %916 = vmatpush1.msra.mxu0 0.0
    %917 = vmatprep.subr.mxu0 0.0
    %918 = vmatpush1.msra.mxu0 0.0
    %919 = vmatprep.subr.mxu0 0.0
    %920 = vmatpush1.msra.mxu0 0.0
    %921 = vmatprep.subr.mxu0 0.0
    %922 = vmatpush1.msra.mxu0 0.0
    %923 = vmatprep.subr.mxu0 0.0
    %924 = vmatpush1.msra.mxu0 0.0
    %925 = vmatprep.mubr.f32.mxu0 0.0
    %926 = vmatmul.mubr.f32.gmra.mrb[0].mxu0 %v778
    %v927 = vpop.f32.mrb[0].mxu0
    %v928 = vpop.f32.mrb[0].mxu0
    %v929 = vadd.f32 0.0, %v928
    %930 = vdwg.mxu0
    %931 = vmatprep.subr.mxu0 0.0
    %932 = vmatpush1.msra.mxu0 %v766
    %933 = vmatprep.subr.mxu0 0.0
    %934 = vmatpush1.msra.mxu0 %v788
    %935 = vmatprep.subr.mxu0 0.0
    %936 = vmatpush1.msra.mxu0 0.0
    %937 = vmatprep.subr.mxu0 0.0
    %938 = vmatpush1.msra.mxu0 0.0
    %939 = vmatprep.subr.mxu0 0.0
    %940 = vmatpush1.msra.mxu0 0.0
    %941 = vmatprep.subr.mxu0 0.0
    %942 = vmatpush1.msra.mxu0 0.0
    %943 = vmatprep.subr.mxu0 0.0
    %944 = vmatpush1.msra.mxu0 0.0
    %945 = vmatprep.subr.mxu0 0.0
    %946 = vmatpush1.msra.mxu0 0.0
    %947 = vmatprep.subr.mxu0 0.0
    %948 = vmatpush1.msra.mxu0 0.0
    %949 = vmatprep.subr.mxu0 0.0
    %950 = vmatpush1.msra.mxu0 0.0
    %951 = vmatprep.subr.mxu0 0.0
    %952 = vmatpush1.msra.mxu0 0.0
    %953 = vmatprep.subr.mxu0 0.0
    %954 = vmatpush1.msra.mxu0 0.0
    %955 = vmatprep.subr.mxu0 0.0
    %956 = vmatpush1.msra.mxu0 0.0
    %957 = vmatprep.subr.mxu0 0.0
    %958 = vmatpush1.msra.mxu0 0.0
    %959 = vmatprep.subr.mxu0 0.0
    %960 = vmatpush1.msra.mxu0 0.0
    %961 = vmatprep.subr.mxu0 0.0
    %962 = vmatpush1.msra.mxu0 0.0
    %963 = vmatprep.subr.mxu0 0.0
    %964 = vmatpush1.msra.mxu0 0.0
    %965 = vmatprep.subr.mxu0 0.0
    %966 = vmatpush1.msra.mxu0 0.0
    %967 = vmatprep.subr.mxu0 0.0
    %968 = vmatpush1.msra.mxu0 0.0
    %969 = vmatprep.subr.mxu0 0.0
    %970 = vmatpush1.msra.mxu0 0.0
    %971 = vmatprep.subr.mxu0 0.0
    %972 = vmatpush1.msra.mxu0 0.0
    %973 = vmatprep.subr.mxu0 0.0
    %974 = vmatpush1.msra.mxu0 0.0
    %975 = vmatprep.subr.mxu0 0.0
    %976 = vmatpush1.msra.mxu0 0.0
    %977 = vmatprep.subr.mxu0 0.0
    %978 = vmatpush1.msra.mxu0 0.0
    %979 = vmatprep.subr.mxu0 0.0
    %980 = vmatpush1.msra.mxu0 0.0
    %981 = vmatprep.subr.mxu0 0.0
    %982 = vmatpush1.msra.mxu0 0.0
    %983 = vmatprep.subr.mxu0 0.0
    %984 = vmatpush1.msra.mxu0 0.0
    %985 = vmatprep.subr.mxu0 0.0
    %986 = vmatpush1.msra.mxu0 0.0
    %987 = vmatprep.subr.mxu0 0.0
    %988 = vmatpush1.msra.mxu0 0.0
    %989 = vmatprep.subr.mxu0 0.0
    %990 = vmatpush1.msra.mxu0 0.0
    %991 = vmatprep.subr.mxu0 0.0
    %992 = vmatpush1.msra.mxu0 0.0
    %993 = vmatprep.subr.mxu0 0.0
    %994 = vmatpush1.msra.mxu0 0.0
    %995 = vmatprep.mubr.f32.mxu0 0.0
    %996 = vmatmul.mubr.f32.gmra.mrb[0].mxu0 %v778
    %v997 = vpop.f32.mrb[0].mxu0
    %v998 = vadd.f32 0.0, %v997
    %v999 = vpop.f32.mrb[0].mxu0
    %1000 = vdwg.mxu0
    %v1002 = vlaneseq
    %v1003 = vshrl.u32 %v1002, 7
    %v1004 = vsub.s32 0, %v1003
    %v1005 = vrot.slane %v89, %v1004
    %v1006 = vlaneseq
    %v1007 = vshrl.u32 %v1006, 7
    %v1008 = vsub.s32 1, %v1007
    %v1009 = vrot.slane %v89, %v1008
    %v1010 = vlaneseq
    %v1011 = vshrl.u32 %v1010, 7
    %v1012 = vsub.s32 3, %v1011
    %v1013 = vrot.slane %v89, %v1012
    %v1014 = vlaneseq
    %v1015 = vshrl.u32 %v1014, 7
    %v1016 = vsub.s32 4, %v1015
    %v1017 = vrot.slane %v89, %v1016
    %v1022 = vmul.f32 %v1005, %v857
    %v1023 = vmul.f32 %v1009, %v859
    %v1024 = vmul.f32 %v1013, %v929
    %v1025 = vmul.f32 %v1017, %v998
    %v1026 = vadd.f32 %v707, %v1022
    %v1027 = vadd.f32 %v708, %v1023
    %v1028 = vadd.f32 %v709, %v1024
    %v1029 = vadd.f32 %v710, %v1025
    %vm1030 = vcmp.gt.f32.partialorder %v1026, 0.0
    %vm1031 = vcmp.gt.f32.partialorder %v1027, 0.0
    %vm1032 = vcmp.gt.f32.partialorder %v1028, 0.0
    %vm1033 = vcmp.gt.f32.partialorder %v1029, 0.0
    %v1034 = vmin.f32 %v1026, 0.0
    %v1035 = vmin.f32 %v1027, 0.0
    %v1036 = vmin.f32 %v1028, 0.0
    %v1037 = vmin.f32 %v1029, 0.0
    %v1038 = vmul.f32 %v1034, 1.442695
    %v1039 = vpow.pop %v1038
    %v1040 = vmul.f32 %v1035, 1.442695
    %v1041 = vpow.pop %v1040
    %v1042 = vmul.f32 %v1036, 1.442695
    %v1043 = vpow.pop %v1042
    %v1044 = vmul.f32 %v1037, 1.442695
    %v1045 = vpow.pop %v1044
    %v1046 = vsub.f32 %v1039, 1.0
    %v1047 = vsub.f32 %v1041, 1.0
    %v1048 = vsub.f32 %v1043, 1.0
    %v1049 = vsub.f32 %v1045, 1.0
    %v1050 = vsel %vm1030, %v1026, %v1046
    %v1051 = vsel %vm1031, %v1027, %v1047
    %v1052 = vsel %vm1032, %v1028, %v1048
    %v1053 = vsel %vm1033, %v1029, %v1049
    %1056 = vrot.lane.b32.xlu0 %v1050, 16
    %v1057 = vpop.permute.xlu0 %1056
    %1058 = vrot.lane.b32.xlu0 %v1051, 16
    %v1059 = vpop.permute.xlu0 %1058
    %v1060 = vsel %vm97, %v1057, %v1059
    %vm1064 = vcmask 1047680
    %1065 = vst.msk [vmem:[#allocation2 + $0x78] sm:$0xff] %vm1064, %v1057
    %1066 = vst [vmem:[#allocation2 + $0x80] sm:$0xff] %v1060
    %1067 = vst.msk [vmem:[#allocation2 + $0x88] sm:$0xff] %vm97, %v1059
    %1068 = vst [vmem:[#allocation2 + $0xb0] sm:$0xff] %v1050
    %1069 = vst [vmem:[#allocation2 + $0xb8] sm:$0xff] %v1051
    %1070 = vrot.lane.b32.xlu0 %v1050, 112
    %v1071 = vpop.permute.xlu0 %1070
    %1072 = vrot.lane.b32.xlu0 %v1051, 112
    %v1073 = vpop.permute.xlu0 %1072
    %v1074 = vsel %vm115, %v1071, %v1073
    %vm1078 = vcmask 1048448
    %1079 = vst.msk [vmem:[#allocation2 + $0xe0] sm:$0xff] %vm1078, %v1071
    %1080 = vst [vmem:[#allocation2 + $0xe8] sm:$0xff] %v1074
    %1081 = vst.msk [vmem:[#allocation2 + $0xf0] sm:$0xff] %vm115, %v1073
    %1084 = vrot.lane.b32.xlu0 %v1052, 16
    %v1085 = vpop.permute.xlu0 %1084
    %1086 = vrot.lane.b32.xlu0 %v1053, 16
    %v1087 = vpop.permute.xlu0 %1086
    %v1088 = vsel %vm97, %v1085, %v1087
    %1092 = vst.msk [vmem:[#allocation2 + $0x90] sm:$0xff] %vm1064, %v1085
    %1093 = vst [vmem:[#allocation2 + $0x98] sm:$0xff] %v1088
    %1094 = vst.msk [vmem:[#allocation2 + $0xa0] sm:$0xff] %vm97, %v1087
    %1095 = vst [vmem:[#allocation2 + $0xc8] sm:$0xff] %v1052
    %1096 = vst [vmem:[#allocation2 + $0xd0] sm:$0xff] %v1053
    %1097 = vrot.lane.b32.xlu0 %v1052, 112
    %v1098 = vpop.permute.xlu0 %1097
    %1099 = vrot.lane.b32.xlu0 %v1053, 112
    %v1100 = vpop.permute.xlu0 %1099
    %v1101 = vsel %vm115, %v1098, %v1100
    %1105 = vst.msk [vmem:[#allocation2 + $0xf8] sm:$0xff] %vm1078, %v1098
    %1106 = vst [vmem:[#allocation2 + $0x100] sm:$0xff] %v1101
    %1107 = vst.msk [vmem:[#allocation2 + $0x108] sm:$0xff] %vm115, %v1100
    %v1108 = vld [vmem:[%s4] sm:$0xff]
    %s1109 = scalar_lea.vmem %s3, 8
    %v1110 = vld [vmem:[%s1109] sm:$0xff]
    %v1111 = vld [vmem:[#allocation2 + $0x78] sm:$0xff]
    %v1112 = vld [vmem:[#allocation2 + $0x80] sm:$0xff]
    %v1113 = vld [vmem:[#allocation2 + $0x88] sm:$0xff]
    %v1114 = vld [vmem:[#allocation2 + $0x90] sm:$0xff]
    %v1115 = vld [vmem:[#allocation2 + $0x98] sm:$0xff]
    %v1116 = vld [vmem:[#allocation2 + $0xb0] sm:$0xff]
    %v1117 = vld [vmem:[#allocation2 + $0xb8] sm:$0xff]
    %v1118 = vld [vmem:[#allocation2 + $0xc0] sm:$0xff]
    %v1119 = vld [vmem:[#allocation2 + $0xc8] sm:$0xff]
    %v1120 = vld [vmem:[#allocation2 + $0xd0] sm:$0xff]
    %v1121 = vld [vmem:[#allocation2 + $0xe8] sm:$0xff]
    %v1122 = vld [vmem:[#allocation2 + $0xf0] sm:$0xff]
    %v1123 = vld [vmem:[#allocation2 + $0xf8] sm:$0xff]
    %v1124 = vld [vmem:[#allocation2 + $0x100] sm:$0xff]
    %v1125 = vld [vmem:[#allocation2 + $0x108] sm:$0xff]
    %vm1126 = vcmask 195584
    %v1128 = vsel %vm1126, %v1110, 0
    %1130 = vmatprep.subr.mxu0 %v1112
    %1131 = vmatpush1.msra.mxu0 %v1111
    %1132 = vmatprep.subr.mxu0 %v1117
    %1133 = vmatpush1.msra.mxu0 %v1116
    %1134 = vmatprep.subr.mxu0 %v1122
    %1135 = vmatpush1.msra.mxu0 %v1121
    %1136 = vmatprep.subr.mxu0 0.0
    %1137 = vmatpush1.msra.mxu0 0.0
    %1138 = vmatprep.subr.mxu0 0.0
    %1139 = vmatpush1.msra.mxu0 0.0
    %1140 = vmatprep.subr.mxu0 0.0
    %1141 = vmatpush1.msra.mxu0 0.0
    %1142 = vmatprep.subr.mxu0 0.0
    %1143 = vmatpush1.msra.mxu0 0.0
    %1144 = vmatprep.subr.mxu0 0.0
    %1145 = vmatpush1.msra.mxu0 0.0
    %1146 = vmatprep.subr.mxu0 0.0
    %1147 = vmatpush1.msra.mxu0 0.0
    %1148 = vmatprep.subr.mxu0 0.0
    %1149 = vmatpush1.msra.mxu0 0.0
    %1150 = vmatprep.subr.mxu0 0.0
    %1151 = vmatpush1.msra.mxu0 0.0
    %1152 = vmatprep.subr.mxu0 0.0
    %1153 = vmatpush1.msra.mxu0 0.0
    %1154 = vmatprep.subr.mxu0 0.0
    %1155 = vmatpush1.msra.mxu0 0.0
    %1156 = vmatprep.subr.mxu0 0.0
    %1157 = vmatpush1.msra.mxu0 0.0
    %1158 = vmatprep.subr.mxu0 0.0
    %1159 = vmatpush1.msra.mxu0 0.0
    %1160 = vmatprep.subr.mxu0 0.0
    %1161 = vmatpush1.msra.mxu0 0.0
    %1162 = vmatprep.subr.mxu0 0.0
    %1163 = vmatpush1.msra.mxu0 0.0
    %1164 = vmatprep.subr.mxu0 0.0
    %1165 = vmatpush1.msra.mxu0 0.0
    %1166 = vmatprep.subr.mxu0 0.0
    %1167 = vmatpush1.msra.mxu0 0.0
    %1168 = vmatprep.subr.mxu0 0.0
    %1169 = vmatpush1.msra.mxu0 0.0
    %1170 = vmatprep.subr.mxu0 0.0
    %1171 = vmatpush1.msra.mxu0 0.0
    %1172 = vmatprep.subr.mxu0 0.0
    %1173 = vmatpush1.msra.mxu0 0.0
    %1174 = vmatprep.subr.mxu0 0.0
    %1175 = vmatpush1.msra.mxu0 0.0
    %1176 = vmatprep.subr.mxu0 0.0
    %1177 = vmatpush1.msra.mxu0 0.0
    %1178 = vmatprep.subr.mxu0 0.0
    %1179 = vmatpush1.msra.mxu0 0.0
    %1180 = vmatprep.subr.mxu0 0.0
    %1181 = vmatpush1.msra.mxu0 0.0
    %1182 = vmatprep.subr.mxu0 0.0
    %1183 = vmatpush1.msra.mxu0 0.0
    %1184 = vmatprep.subr.mxu0 0.0
    %1185 = vmatpush1.msra.mxu0 0.0
    %1186 = vmatprep.subr.mxu0 0.0
    %1187 = vmatpush1.msra.mxu0 0.0
    %1188 = vmatprep.subr.mxu0 0.0
    %1189 = vmatpush1.msra.mxu0 0.0
    %1190 = vmatprep.subr.mxu0 0.0
    %1191 = vmatpush1.msra.mxu0 0.0
    %1192 = vmatprep.subr.mxu0 0.0
    %1193 = vmatpush1.msra.mxu0 0.0
    %1194 = vmatprep.mubr.f32.mxu0 0.0
    %1195 = vmatmul.mubr.f32.gmra.mrb[0].mxu0 %v1128
    %v1196 = vpop.f32.mrb[0].mxu0
    %v1197 = vadd.f32 0.0, %v1196
    %v1198 = vpop.f32.mrb[0].mxu0
    %v1199 = vadd.f32 0.0, %v1198
    %1200 = vdwg.mxu0
    %1201 = vmatprep.subr.mxu0 %v1114
    %1202 = vmatpush1.msra.mxu0 %v1113
    %1203 = vmatprep.subr.mxu0 %v1119
    %1204 = vmatpush1.msra.mxu0 %v1118
    %1205 = vmatprep.subr.mxu0 %v1124
    %1206 = vmatpush1.msra.mxu0 %v1123
    %1207 = vmatprep.subr.mxu0 0.0
    %1208 = vmatpush1.msra.mxu0 0.0
    %1209 = vmatprep.subr.mxu0 0.0
    %1210 = vmatpush1.msra.mxu0 0.0
    %1211 = vmatprep.subr.mxu0 0.0
    %1212 = vmatpush1.msra.mxu0 0.0
    %1213 = vmatprep.subr.mxu0 0.0
    %1214 = vmatpush1.msra.mxu0 0.0
    %1215 = vmatprep.subr.mxu0 0.0
    %1216 = vmatpush1.msra.mxu0 0.0
    %1217 = vmatprep.subr.mxu0 0.0
    %1218 = vmatpush1.msra.mxu0 0.0
    %1219 = vmatprep.subr.mxu0 0.0
    %1220 = vmatpush1.msra.mxu0 0.0
    %1221 = vmatprep.subr.mxu0 0.0
    %1222 = vmatpush1.msra.mxu0 0.0
    %1223 = vmatprep.subr.mxu0 0.0
    %1224 = vmatpush1.msra.mxu0 0.0
    %1225 = vmatprep.subr.mxu0 0.0
    %1226 = vmatpush1.msra.mxu0 0.0
    %1227 = vmatprep.subr.mxu0 0.0
    %1228 = vmatpush1.msra.mxu0 0.0
    %1229 = vmatprep.subr.mxu0 0.0
    %1230 = vmatpush1.msra.mxu0 0.0
    %1231 = vmatprep.subr.mxu0 0.0
    %1232 = vmatpush1.msra.mxu0 0.0
    %1233 = vmatprep.subr.mxu0 0.0
    %1234 = vmatpush1.msra.mxu0 0.0
    %1235 = vmatprep.subr.mxu0 0.0
    %1236 = vmatpush1.msra.mxu0 0.0
    %1237 = vmatprep.subr.mxu0 0.0
    %1238 = vmatpush1.msra.mxu0 0.0
    %1239 = vmatprep.subr.mxu0 0.0
    %1240 = vmatpush1.msra.mxu0 0.0
    %1241 = vmatprep.subr.mxu0 0.0
    %1242 = vmatpush1.msra.mxu0 0.0
    %1243 = vmatprep.subr.mxu0 0.0
    %1244 = vmatpush1.msra.mxu0 0.0
    %1245 = vmatprep.subr.mxu0 0.0
    %1246 = vmatpush1.msra.mxu0 0.0
    %1247 = vmatprep.subr.mxu0 0.0
    %1248 = vmatpush1.msra.mxu0 0.0
    %1249 = vmatprep.subr.mxu0 0.0
    %1250 = vmatpush1.msra.mxu0 0.0
    %1251 = vmatprep.subr.mxu0 0.0
    %1252 = vmatpush1.msra.mxu0 0.0
    %1253 = vmatprep.subr.mxu0 0.0
    %1254 = vmatpush1.msra.mxu0 0.0
    %1255 = vmatprep.subr.mxu0 0.0
    %1256 = vmatpush1.msra.mxu0 0.0
    %1257 = vmatprep.subr.mxu0 0.0
    %1258 = vmatpush1.msra.mxu0 0.0
    %1259 = vmatprep.subr.mxu0 0.0
    %1260 = vmatpush1.msra.mxu0 0.0
    %1261 = vmatprep.subr.mxu0 0.0
    %1262 = vmatpush1.msra.mxu0 0.0
    %1263 = vmatprep.subr.mxu0 0.0
    %1264 = vmatpush1.msra.mxu0 0.0
    %1265 = vmatprep.mubr.f32.mxu0 0.0
    %1266 = vmatmul.mubr.f32.gmra.mrb[0].mxu0 %v1128
    %v1267 = vpop.f32.mrb[0].mxu0
    %v1268 = vpop.f32.mrb[0].mxu0
    %v1269 = vadd.f32 0.0, %v1268
    %1270 = vdwg.mxu0
    %1271 = vmatprep.subr.mxu0 0.0
    %1272 = vmatpush1.msra.mxu0 %v1115
    %1273 = vmatprep.subr.mxu0 0.0
    %1274 = vmatpush1.msra.mxu0 %v1120
    %1275 = vmatprep.subr.mxu0 0.0
    %1276 = vmatpush1.msra.mxu0 %v1125
    %1277 = vmatprep.subr.mxu0 0.0
    %1278 = vmatpush1.msra.mxu0 0.0
    %1279 = vmatprep.subr.mxu0 0.0
    %1280 = vmatpush1.msra.mxu0 0.0
    %1281 = vmatprep.subr.mxu0 0.0
    %1282 = vmatpush1.msra.mxu0 0.0
    %1283 = vmatprep.subr.mxu0 0.0
    %1284 = vmatpush1.msra.mxu0 0.0
    %1285 = vmatprep.subr.mxu0 0.0
    %1286 = vmatpush1.msra.mxu0 0.0
    %1287 = vmatprep.subr.mxu0 0.0
    %1288 = vmatpush1.msra.mxu0 0.0
    %1289 = vmatprep.subr.mxu0 0.0
    %1290 = vmatpush1.msra.mxu0 0.0
    %1291 = vmatprep.subr.mxu0 0.0
    %1292 = vmatpush1.msra.mxu0 0.0
    %1293 = vmatprep.subr.mxu0 0.0
    %1294 = vmatpush1.msra.mxu0 0.0
    %1295 = vmatprep.subr.mxu0 0.0
    %1296 = vmatpush1.msra.mxu0 0.0
    %1297 = vmatprep.subr.mxu0 0.0
    %1298 = vmatpush1.msra.mxu0 0.0
    %1299 = vmatprep.subr.mxu0 0.0
    %1300 = vmatpush1.msra.mxu0 0.0
    %1301 = vmatprep.subr.mxu0 0.0
    %1302 = vmatpush1.msra.mxu0 0.0
    %1303 = vmatprep.subr.mxu0 0.0
    %1304 = vmatpush1.msra.mxu0 0.0
    %1305 = vmatprep.subr.mxu0 0.0
    %1306 = vmatpush1.msra.mxu0 0.0
    %1307 = vmatprep.subr.mxu0 0.0
    %1308 = vmatpush1.msra.mxu0 0.0
    %1309 = vmatprep.subr.mxu0 0.0
    %1310 = vmatpush1.msra.mxu0 0.0
    %1311 = vmatprep.subr.mxu0 0.0
    %1312 = vmatpush1.msra.mxu0 0.0
    %1313 = vmatprep.subr.mxu0 0.0
    %1314 = vmatpush1.msra.mxu0 0.0
    %1315 = vmatprep.subr.mxu0 0.0
    %1316 = vmatpush1.msra.mxu0 0.0
    %1317 = vmatprep.subr.mxu0 0.0
    %1318 = vmatpush1.msra.mxu0 0.0
    %1319 = vmatprep.subr.mxu0 0.0
    %1320 = vmatpush1.msra.mxu0 0.0
    %1321 = vmatprep.subr.mxu0 0.0
    %1322 = vmatpush1.msra.mxu0 0.0
    %1323 = vmatprep.subr.mxu0 0.0
    %1324 = vmatpush1.msra.mxu0 0.0
    %1325 = vmatprep.subr.mxu0 0.0
    %1326 = vmatpush1.msra.mxu0 0.0
    %1327 = vmatprep.subr.mxu0 0.0
    %1328 = vmatpush1.msra.mxu0 0.0
    %1329 = vmatprep.subr.mxu0 0.0
    %1330 = vmatpush1.msra.mxu0 0.0
    %1331 = vmatprep.subr.mxu0 0.0
    %1332 = vmatpush1.msra.mxu0 0.0
    %1333 = vmatprep.subr.mxu0 0.0
    %1334 = vmatpush1.msra.mxu0 0.0
    %1335 = vmatprep.mubr.f32.mxu0 0.0
    %1336 = vmatmul.mubr.f32.gmra.mrb[0].mxu0 %v1128
    %v1337 = vpop.f32.mrb[0].mxu0
    %v1338 = vadd.f32 0.0, %v1337
    %v1339 = vpop.f32.mrb[0].mxu0
    %1340 = vdwg.mxu0
    %1342 = vset.pattern.permute.xlu0 0
    %1343 = vperm.xlu0 %1342, %v1108
    %v1344 = vpop.permute.xlu0 %1343
    %v1346 = vadd.f32 %v1344, %v1197
    %v1347 = vadd.f32 %v1344, %v1199
    %v1348 = vadd.f32 %v1344, %v1269
    %v1349 = vadd.f32 %v1344, %v1338
    %v1350 = vld [vmem:[%s3] sm:$0xff]
    %v1351 = vld [vmem:[#allocation2 + $0x70] sm:$0xff]
    %v1352 = vld [vmem:[#allocation2 + $0xa8] sm:$0xff]
    %v1353 = vld [vmem:[#allocation2 + $0xe0] sm:$0xff]
    %1372 = vrot.lane.b32.xlu0 %v1351, 1
    %v1373 = vpop.permute.xlu0 %1372
    %1374 = vrot.lane.b32.xlu0 %v1111, 1
    %v1375 = vpop.permute.xlu0 %1374
    %1376 = vrot.lane.b32.xlu0 %v1112, 1
    %v1377 = vpop.permute.xlu0 %1376
    %1378 = vrot.lane.b32.xlu0 %v1113, 1
    %v1379 = vpop.permute.xlu0 %1378
    %1380 = vrot.lane.b32.xlu0 %v1114, 1
    %v1381 = vpop.permute.xlu0 %1380
    %1382 = vrot.lane.b32.xlu0 %v1115, 1
    %v1383 = vpop.permute.xlu0 %1382
    %1384 = vrot.lane.b32.xlu0 %v1352, 1
    %v1385 = vpop.permute.xlu0 %1384
    %1386 = vrot.lane.b32.xlu0 %v1116, 1
    %v1387 = vpop.permute.xlu0 %1386
    %1388 = vrot.lane.b32.xlu0 %v1117, 1
    %v1389 = vpop.permute.xlu0 %1388
    %1390 = vrot.lane.b32.xlu0 %v1118, 1
    %v1391 = vpop.permute.xlu0 %1390
    %1392 = vrot.lane.b32.xlu0 %v1119, 1
    %v1393 = vpop.permute.xlu0 %1392
    %1394 = vrot.lane.b32.xlu0 %v1120, 1
    %v1395 = vpop.permute.xlu0 %1394
    %1396 = vrot.lane.b32.xlu0 %v1353, 1
    %v1397 = vpop.permute.xlu0 %1396
    %1398 = vrot.lane.b32.xlu0 %v1121, 1
    %v1399 = vpop.permute.xlu0 %1398
    %1400 = vrot.lane.b32.xlu0 %v1122, 1
    %v1401 = vpop.permute.xlu0 %1400
    %1402 = vrot.lane.b32.xlu0 %v1123, 1
    %v1403 = vpop.permute.xlu0 %1402
    %1404 = vrot.lane.b32.xlu0 %v1124, 1
    %v1405 = vpop.permute.xlu0 %1404
    %1406 = vrot.lane.b32.xlu0 %v1125, 1
    %v1407 = vpop.permute.xlu0 %1406
    %v1408 = vsel %vm442, %v1373, %v1375
    %v1409 = vsel %vm442, %v1375, %v1377
    %v1410 = vsel %vm442, %v1377, %v1379
    %v1411 = vsel %vm442, %v1379, %v1381
    %v1412 = vsel %vm442, %v1381, %v1383
    %v1413 = vsel %vm442, %v1385, %v1387
    %v1414 = vsel %vm442, %v1387, %v1389
    %v1415 = vsel %vm442, %v1389, %v1391
    %v1416 = vsel %vm442, %v1391, %v1393
    %v1417 = vsel %vm442, %v1393, %v1395
    %v1418 = vsel %vm442, %v1397, %v1399
    %v1419 = vsel %vm442, %v1399, %v1401
    %v1420 = vsel %vm442, %v1401, %v1403
    %v1421 = vsel %vm442, %v1403, %v1405
    %v1422 = vsel %vm442, %v1405, %v1407
    %v1439 = vsel %vm1126, %v1350, 0
    %1441 = vmatprep.subr.mxu0 %v1409
    %1442 = vmatpush1.msra.mxu0 %v1408
    %1443 = vmatprep.subr.mxu0 %v1414
    %1444 = vmatpush1.msra.mxu0 %v1413
    %1445 = vmatprep.subr.mxu0 %v1419
    %1446 = vmatpush1.msra.mxu0 %v1418
    %1447 = vmatprep.subr.mxu0 0.0
    %1448 = vmatpush1.msra.mxu0 0.0
    %1449 = vmatprep.subr.mxu0 0.0
    %1450 = vmatpush1.msra.mxu0 0.0
    %1451 = vmatprep.subr.mxu0 0.0
    %1452 = vmatpush1.msra.mxu0 0.0
    %1453 = vmatprep.subr.mxu0 0.0
    %1454 = vmatpush1.msra.mxu0 0.0
    %1455 = vmatprep.subr.mxu0 0.0
    %1456 = vmatpush1.msra.mxu0 0.0
    %1457 = vmatprep.subr.mxu0 0.0
    %1458 = vmatpush1.msra.mxu0 0.0
    %1459 = vmatprep.subr.mxu0 0.0
    %1460 = vmatpush1.msra.mxu0 0.0
    %1461 = vmatprep.subr.mxu0 0.0
    %1462 = vmatpush1.msra.mxu0 0.0
    %1463 = vmatprep.subr.mxu0 0.0
    %1464 = vmatpush1.msra.mxu0 0.0
    %1465 = vmatprep.subr.mxu0 0.0
    %1466 = vmatpush1.msra.mxu0 0.0
    %1467 = vmatprep.subr.mxu0 0.0
    %1468 = vmatpush1.msra.mxu0 0.0
    %1469 = vmatprep.subr.mxu0 0.0
    %1470 = vmatpush1.msra.mxu0 0.0
    %1471 = vmatprep.subr.mxu0 0.0
    %1472 = vmatpush1.msra.mxu0 0.0
    %1473 = vmatprep.subr.mxu0 0.0
    %1474 = vmatpush1.msra.mxu0 0.0
    %1475 = vmatprep.subr.mxu0 0.0
    %1476 = vmatpush1.msra.mxu0 0.0
    %1477 = vmatprep.subr.mxu0 0.0
    %1478 = vmatpush1.msra.mxu0 0.0
    %1479 = vmatprep.subr.mxu0 0.0
    %1480 = vmatpush1.msra.mxu0 0.0
    %1481 = vmatprep.subr.mxu0 0.0
    %1482 = vmatpush1.msra.mxu0 0.0
    %1483 = vmatprep.subr.mxu0 0.0
    %1484 = vmatpush1.msra.mxu0 0.0
    %1485 = vmatprep.subr.mxu0 0.0
    %1486 = vmatpush1.msra.mxu0 0.0
    %1487 = vmatprep.subr.mxu0 0.0
    %1488 = vmatpush1.msra.mxu0 0.0
    %1489 = vmatprep.subr.mxu0 0.0
    %1490 = vmatpush1.msra.mxu0 0.0
    %1491 = vmatprep.subr.mxu0 0.0
    %1492 = vmatpush1.msra.mxu0 0.0
    %1493 = vmatprep.subr.mxu0 0.0
    %1494 = vmatpush1.msra.mxu0 0.0
    %1495 = vmatprep.subr.mxu0 0.0
    %1496 = vmatpush1.msra.mxu0 0.0
    %1497 = vmatprep.subr.mxu0 0.0
    %1498 = vmatpush1.msra.mxu0 0.0
    %1499 = vmatprep.subr.mxu0 0.0
    %1500 = vmatpush1.msra.mxu0 0.0
    %1501 = vmatprep.subr.mxu0 0.0
    %1502 = vmatpush1.msra.mxu0 0.0
    %1503 = vmatprep.subr.mxu0 0.0
    %1504 = vmatpush1.msra.mxu0 0.0
    %1505 = vmatprep.mubr.f32.mxu0 0.0
    %1506 = vmatmul.mubr.f32.gmra.mrb[0].mxu0 %v1439
    %v1507 = vpop.f32.mrb[0].mxu0
    %v1508 = vadd.f32 0.0, %v1507
    %v1509 = vpop.f32.mrb[0].mxu0
    %v1510 = vadd.f32 0.0, %v1509
    %1511 = vdwg.mxu0
    %1512 = vmatprep.subr.mxu0 %v1411
    %1513 = vmatpush1.msra.mxu0 %v1410
    %1514 = vmatprep.subr.mxu0 %v1416
    %1515 = vmatpush1.msra.mxu0 %v1415
    %1516 = vmatprep.subr.mxu0 %v1421
    %1517 = vmatpush1.msra.mxu0 %v1420
    %1518 = vmatprep.subr.mxu0 0.0
    %1519 = vmatpush1.msra.mxu0 0.0
    %1520 = vmatprep.subr.mxu0 0.0
    %1521 = vmatpush1.msra.mxu0 0.0
    %1522 = vmatprep.subr.mxu0 0.0
    %1523 = vmatpush1.msra.mxu0 0.0
    %1524 = vmatprep.subr.mxu0 0.0
    %1525 = vmatpush1.msra.mxu0 0.0
    %1526 = vmatprep.subr.mxu0 0.0
    %1527 = vmatpush1.msra.mxu0 0.0
    %1528 = vmatprep.subr.mxu0 0.0
    %1529 = vmatpush1.msra.mxu0 0.0
    %1530 = vmatprep.subr.mxu0 0.0
    %1531 = vmatpush1.msra.mxu0 0.0
    %1532 = vmatprep.subr.mxu0 0.0
    %1533 = vmatpush1.msra.mxu0 0.0
    %1534 = vmatprep.subr.mxu0 0.0
    %1535 = vmatpush1.msra.mxu0 0.0
    %1536 = vmatprep.subr.mxu0 0.0
    %1537 = vmatpush1.msra.mxu0 0.0
    %1538 = vmatprep.subr.mxu0 0.0
    %1539 = vmatpush1.msra.mxu0 0.0
    %1540 = vmatprep.subr.mxu0 0.0
    %1541 = vmatpush1.msra.mxu0 0.0
    %1542 = vmatprep.subr.mxu0 0.0
    %1543 = vmatpush1.msra.mxu0 0.0
    %1544 = vmatprep.subr.mxu0 0.0
    %1545 = vmatpush1.msra.mxu0 0.0
    %1546 = vmatprep.subr.mxu0 0.0
    %1547 = vmatpush1.msra.mxu0 0.0
    %1548 = vmatprep.subr.mxu0 0.0
    %1549 = vmatpush1.msra.mxu0 0.0
    %1550 = vmatprep.subr.mxu0 0.0
    %1551 = vmatpush1.msra.mxu0 0.0
    %1552 = vmatprep.subr.mxu0 0.0
    %1553 = vmatpush1.msra.mxu0 0.0
    %1554 = vmatprep.subr.mxu0 0.0
    %1555 = vmatpush1.msra.mxu0 0.0
    %1556 = vmatprep.subr.mxu0 0.0
    %1557 = vmatpush1.msra.mxu0 0.0
    %1558 = vmatprep.subr.mxu0 0.0
    %1559 = vmatpush1.msra.mxu0 0.0
    %1560 = vmatprep.subr.mxu0 0.0
    %1561 = vmatpush1.msra.mxu0 0.0
    %1562 = vmatprep.subr.mxu0 0.0
    %1563 = vmatpush1.msra.mxu0 0.0
    %1564 = vmatprep.subr.mxu0 0.0
    %1565 = vmatpush1.msra.mxu0 0.0
    %1566 = vmatprep.subr.mxu0 0.0
    %1567 = vmatpush1.msra.mxu0 0.0
    %1568 = vmatprep.subr.mxu0 0.0
    %1569 = vmatpush1.msra.mxu0 0.0
    %1570 = vmatprep.subr.mxu0 0.0
    %1571 = vmatpush1.msra.mxu0 0.0
    %1572 = vmatprep.subr.mxu0 0.0
    %1573 = vmatpush1.msra.mxu0 0.0
    %1574 = vmatprep.subr.mxu0 0.0
    %1575 = vmatpush1.msra.mxu0 0.0
    %1576 = vmatprep.mubr.f32.mxu0 0.0
    %1577 = vmatmul.mubr.f32.gmra.mrb[0].mxu0 %v1439
    %v1578 = vpop.f32.mrb[0].mxu0
    %v1579 = vpop.f32.mrb[0].mxu0
    %v1580 = vadd.f32 0.0, %v1579
    %1581 = vdwg.mxu0
    %1582 = vmatprep.subr.mxu0 0.0
    %1583 = vmatpush1.msra.mxu0 %v1412
    %1584 = vmatprep.subr.mxu0 0.0
    %1585 = vmatpush1.msra.mxu0 %v1417
    %1586 = vmatprep.subr.mxu0 0.0
    %1587 = vmatpush1.msra.mxu0 %v1422
    %1588 = vmatprep.subr.mxu0 0.0
    %1589 = vmatpush1.msra.mxu0 0.0
    %1590 = vmatprep.subr.mxu0 0.0
    %1591 = vmatpush1.msra.mxu0 0.0
    %1592 = vmatprep.subr.mxu0 0.0
    %1593 = vmatpush1.msra.mxu0 0.0
    %1594 = vmatprep.subr.mxu0 0.0
    %1595 = vmatpush1.msra.mxu0 0.0
    %1596 = vmatprep.subr.mxu0 0.0
    %1597 = vmatpush1.msra.mxu0 0.0
    %1598 = vmatprep.subr.mxu0 0.0
    %1599 = vmatpush1.msra.mxu0 0.0
    %1600 = vmatprep.subr.mxu0 0.0
    %1601 = vmatpush1.msra.mxu0 0.0
    %1602 = vmatprep.subr.mxu0 0.0
    %1603 = vmatpush1.msra.mxu0 0.0
    %1604 = vmatprep.subr.mxu0 0.0
    %1605 = vmatpush1.msra.mxu0 0.0
    %1606 = vmatprep.subr.mxu0 0.0
    %1607 = vmatpush1.msra.mxu0 0.0
    %1608 = vmatprep.subr.mxu0 0.0
    %1609 = vmatpush1.msra.mxu0 0.0
    %1610 = vmatprep.subr.mxu0 0.0
    %1611 = vmatpush1.msra.mxu0 0.0
    %1612 = vmatprep.subr.mxu0 0.0
    %1613 = vmatpush1.msra.mxu0 0.0
    %1614 = vmatprep.subr.mxu0 0.0
    %1615 = vmatpush1.msra.mxu0 0.0
    %1616 = vmatprep.subr.mxu0 0.0
    %1617 = vmatpush1.msra.mxu0 0.0
    %1618 = vmatprep.subr.mxu0 0.0
    %1619 = vmatpush1.msra.mxu0 0.0
    %1620 = vmatprep.subr.mxu0 0.0
    %1621 = vmatpush1.msra.mxu0 0.0
    %1622 = vmatprep.subr.mxu0 0.0
    %1623 = vmatpush1.msra.mxu0 0.0
    %1624 = vmatprep.subr.mxu0 0.0
    %1625 = vmatpush1.msra.mxu0 0.0
    %1626 = vmatprep.subr.mxu0 0.0
    %1627 = vmatpush1.msra.mxu0 0.0
    %1628 = vmatprep.subr.mxu0 0.0
    %1629 = vmatpush1.msra.mxu0 0.0
    %1630 = vmatprep.subr.mxu0 0.0
    %1631 = vmatpush1.msra.mxu0 0.0
    %1632 = vmatprep.subr.mxu0 0.0
    %1633 = vmatpush1.msra.mxu0 0.0
    %1634 = vmatprep.subr.mxu0 0.0
    %1635 = vmatpush1.msra.mxu0 0.0
    %1636 = vmatprep.subr.mxu0 0.0
    %1637 = vmatpush1.msra.mxu0 0.0
    %1638 = vmatprep.subr.mxu0 0.0
    %1639 = vmatpush1.msra.mxu0 0.0
    %1640 = vmatprep.subr.mxu0 0.0
    %1641 = vmatpush1.msra.mxu0 0.0
    %1642 = vmatprep.subr.mxu0 0.0
    %1643 = vmatpush1.msra.mxu0 0.0
    %1644 = vmatprep.subr.mxu0 0.0
    %1645 = vmatpush1.msra.mxu0 0.0
    %1646 = vmatprep.mubr.f32.mxu0 0.0
    %1647 = vmatmul.mubr.f32.gmra.mrb[0].mxu0 %v1439
    %v1648 = vpop.f32.mrb[0].mxu0
    %v1649 = vadd.f32 0.0, %v1648
    %v1650 = vpop.f32.mrb[0].mxu0
    %1651 = vdwg.mxu0
    %v1652 = vmul.f32 %v686, %v1508
    %v1653 = vmul.f32 %v690, %v1510
    %v1654 = vmul.f32 %v694, %v1580
    %v1655 = vmul.f32 %v698, %v1649
    %v1656 = vadd.f32 %v1346, %v1652
    %v1657 = vadd.f32 %v1347, %v1653
    %v1658 = vadd.f32 %v1348, %v1654
    %v1659 = vadd.f32 %v1349, %v1655
    %s1660 = scalar_lea.vmem %s3, 16
    %v1661 = vld [vmem:[%s1660] sm:$0xff]
    %v1662 = vld [vmem:[#allocation2 + $0x78] sm:$0xff]
    %v1663 = vld [vmem:[#allocation2 + $0x80] sm:$0xff]
    %v1664 = vld [vmem:[#allocation2 + $0x88] sm:$0xff]
    %v1665 = vld [vmem:[#allocation2 + $0x90] sm:$0xff]
    %v1666 = vld [vmem:[#allocation2 + $0x98] sm:$0xff]
    %v1667 = vld [vmem:[#allocation2 + $0xa0] sm:$0xff]
    %v1668 = vld [vmem:[#allocation2 + $0xb0] sm:$0xff]
    %v1669 = vld [vmem:[#allocation2 + $0xb8] sm:$0xff]
    %v1670 = vld [vmem:[#allocation2 + $0xc0] sm:$0xff]
    %v1671 = vld [vmem:[#allocation2 + $0xc8] sm:$0xff]
    %v1672 = vld [vmem:[#allocation2 + $0xd0] sm:$0xff]
    %v1673 = vld [vmem:[#allocation2 + $0xd8] sm:$0xff]
    %v1674 = vld [vmem:[#allocation2 + $0xe8] sm:$0xff]
    %v1675 = vld [vmem:[#allocation2 + $0xf0] sm:$0xff]
    %v1676 = vld [vmem:[#allocation2 + $0xf8] sm:$0xff]
    %v1677 = vld [vmem:[#allocation2 + $0x100] sm:$0xff]
    %v1678 = vld [vmem:[#allocation2 + $0x108] sm:$0xff]
    %v1679 = vld [vmem:[#allocation2 + $0x110] sm:$0xff]
    %1698 = vrot.lane.b32.xlu0 %v1662, 127
    %v1699 = vpop.permute.xlu0 %1698
    %1700 = vrot.lane.b32.xlu0 %v1663, 127
    %v1701 = vpop.permute.xlu0 %1700
    %1702 = vrot.lane.b32.xlu0 %v1664, 127
    %v1703 = vpop.permute.xlu0 %1702
    %1704 = vrot.lane.b32.xlu0 %v1665, 127
    %v1705 = vpop.permute.xlu0 %1704
    %1706 = vrot.lane.b32.xlu0 %v1666, 127
    %v1707 = vpop.permute.xlu0 %1706
    %1708 = vrot.lane.b32.xlu0 %v1667, 127
    %v1709 = vpop.permute.xlu0 %1708
    %1710 = vrot.lane.b32.xlu0 %v1668, 127
    %v1711 = vpop.permute.xlu0 %1710
    %1712 = vrot.lane.b32.xlu0 %v1669, 127
    %v1713 = vpop.permute.xlu0 %1712
    %1714 = vrot.lane.b32.xlu0 %v1670, 127
    %v1715 = vpop.permute.xlu0 %1714
    %1716 = vrot.lane.b32.xlu0 %v1671, 127
    %v1717 = vpop.permute.xlu0 %1716
    %1718 = vrot.lane.b32.xlu0 %v1672, 127
    %v1719 = vpop.permute.xlu0 %1718
    %1720 = vrot.lane.b32.xlu0 %v1673, 127
    %v1721 = vpop.permute.xlu0 %1720
    %1722 = vrot.lane.b32.xlu0 %v1674, 127
    %v1723 = vpop.permute.xlu0 %1722
    %1724 = vrot.lane.b32.xlu0 %v1675, 127
    %v1725 = vpop.permute.xlu0 %1724
    %1726 = vrot.lane.b32.xlu0 %v1676, 127
    %v1727 = vpop.permute.xlu0 %1726
    %1728 = vrot.lane.b32.xlu0 %v1677, 127
    %v1729 = vpop.permute.xlu0 %1728
    %1730 = vrot.lane.b32.xlu0 %v1678, 127
    %v1731 = vpop.permute.xlu0 %1730
    %1732 = vrot.lane.b32.xlu0 %v1679, 127
    %v1733 = vpop.permute.xlu0 %1732
    %v1734 = vsel %vm761, %v1699, %v1701
    %v1735 = vsel %vm761, %v1701, %v1703
    %v1736 = vsel %vm761, %v1703, %v1705
    %v1737 = vsel %vm761, %v1705, %v1707
    %v1738 = vsel %vm761, %v1707, %v1709
    %v1739 = vsel %vm761, %v1711, %v1713
    %v1740 = vsel %vm761, %v1713, %v1715
    %v1741 = vsel %vm761, %v1715, %v1717
    %v1742 = vsel %vm761, %v1717, %v1719
    %v1743 = vsel %vm761, %v1719, %v1721
    %v1744 = vsel %vm761, %v1723, %v1725
    %v1745 = vsel %vm761, %v1725, %v1727
    %v1746 = vsel %vm761, %v1727, %v1729
    %v1747 = vsel %vm761, %v1729, %v1731
    %v1748 = vsel %vm761, %v1731, %v1733
    %v1765 = vsel %vm1126, %v1661, 0
    %1767 = vmatprep.subr.mxu0 %v1735
    %1768 = vmatpush1.msra.mxu0 %v1734
    %1769 = vmatprep.subr.mxu0 %v1740
    %1770 = vmatpush1.msra.mxu0 %v1739
    %1771 = vmatprep.subr.mxu0 %v1745
    %1772 = vmatpush1.msra.mxu0 %v1744
    %1773 = vmatprep.subr.mxu0 0.0
    %1774 = vmatpush1.msra.mxu0 0.0
    %1775 = vmatprep.subr.mxu0 0.0
    %1776 = vmatpush1.msra.mxu0 0.0
    %1777 = vmatprep.subr.mxu0 0.0
    %1778 = vmatpush1.msra.mxu0 0.0
    %1779 = vmatprep.subr.mxu0 0.0
    %1780 = vmatpush1.msra.mxu0 0.0
    %1781 = vmatprep.subr.mxu0 0.0
    %1782 = vmatpush1.msra.mxu0 0.0
    %1783 = vmatprep.subr.mxu0 0.0
    %1784 = vmatpush1.msra.mxu0 0.0
    %1785 = vmatprep.subr.mxu0 0.0
    %1786 = vmatpush1.msra.mxu0 0.0
    %1787 = vmatprep.subr.mxu0 0.0
    %1788 = vmatpush1.msra.mxu0 0.0
    %1789 = vmatprep.subr.mxu0 0.0
    %1790 = vmatpush1.msra.mxu0 0.0
    %1791 = vmatprep.subr.mxu0 0.0
    %1792 = vmatpush1.msra.mxu0 0.0
    %1793 = vmatprep.subr.mxu0 0.0
    %1794 = vmatpush1.msra.mxu0 0.0
    %1795 = vmatprep.subr.mxu0 0.0
    %1796 = vmatpush1.msra.mxu0 0.0
    %1797 = vmatprep.subr.mxu0 0.0
    %1798 = vmatpush1.msra.mxu0 0.0
    %1799 = vmatprep.subr.mxu0 0.0
    %1800 = vmatpush1.msra.mxu0 0.0
    %1801 = vmatprep.subr.mxu0 0.0
    %1802 = vmatpush1.msra.mxu0 0.0
    %1803 = vmatprep.subr.mxu0 0.0
    %1804 = vmatpush1.msra.mxu0 0.0
    %1805 = vmatprep.subr.mxu0 0.0
    %1806 = vmatpush1.msra.mxu0 0.0
    %1807 = vmatprep.subr.mxu0 0.0
    %1808 = vmatpush1.msra.mxu0 0.0
    %1809 = vmatprep.subr.mxu0 0.0
    %1810 = vmatpush1.msra.mxu0 0.0
    %1811 = vmatprep.subr.mxu0 0.0
    %1812 = vmatpush1.msra.mxu0 0.0
    %1813 = vmatprep.subr.mxu0 0.0
    %1814 = vmatpush1.msra.mxu0 0.0
    %1815 = vmatprep.subr.mxu0 0.0
    %1816 = vmatpush1.msra.mxu0 0.0
    %1817 = vmatprep.subr.mxu0 0.0
    %1818 = vmatpush1.msra.mxu0 0.0
    %1819 = vmatprep.subr.mxu0 0.0
    %1820 = vmatpush1.msra.mxu0 0.0
    %1821 = vmatprep.subr.mxu0 0.0
    %1822 = vmatpush1.msra.mxu0 0.0
    %1823 = vmatprep.subr.mxu0 0.0
    %1824 = vmatpush1.msra.mxu0 0.0
    %1825 = vmatprep.subr.mxu0 0.0
    %1826 = vmatpush1.msra.mxu0 0.0
    %1827 = vmatprep.subr.mxu0 0.0
    %1828 = vmatpush1.msra.mxu0 0.0
    %1829 = vmatprep.subr.mxu0 0.0
    %1830 = vmatpush1.msra.mxu0 0.0
    %1831 = vmatprep.mubr.f32.mxu0 0.0
    %1832 = vmatmul.mubr.f32.gmra.mrb[0].mxu0 %v1765
    %v1833 = vpop.f32.mrb[0].mxu0
    %v1834 = vadd.f32 0.0, %v1833
    %v1835 = vpop.f32.mrb[0].mxu0
    %v1836 = vadd.f32 0.0, %v1835
    %1837 = vdwg.mxu0
    %1838 = vmatprep.subr.mxu0 %v1737
    %1839 = vmatpush1.msra.mxu0 %v1736
    %1840 = vmatprep.subr.mxu0 %v1742
    %1841 = vmatpush1.msra.mxu0 %v1741
    %1842 = vmatprep.subr.mxu0 %v1747
    %1843 = vmatpush1.msra.mxu0 %v1746
    %1844 = vmatprep.subr.mxu0 0.0
    %1845 = vmatpush1.msra.mxu0 0.0
    %1846 = vmatprep.subr.mxu0 0.0
    %1847 = vmatpush1.msra.mxu0 0.0
    %1848 = vmatprep.subr.mxu0 0.0
    %1849 = vmatpush1.msra.mxu0 0.0
    %1850 = vmatprep.subr.mxu0 0.0
    %1851 = vmatpush1.msra.mxu0 0.0
    %1852 = vmatprep.subr.mxu0 0.0
    %1853 = vmatpush1.msra.mxu0 0.0
    %1854 = vmatprep.subr.mxu0 0.0
    %1855 = vmatpush1.msra.mxu0 0.0
    %1856 = vmatprep.subr.mxu0 0.0
    %1857 = vmatpush1.msra.mxu0 0.0
    %1858 = vmatprep.subr.mxu0 0.0
    %1859 = vmatpush1.msra.mxu0 0.0
    %1860 = vmatprep.subr.mxu0 0.0
    %1861 = vmatpush1.msra.mxu0 0.0
    %1862 = vmatprep.subr.mxu0 0.0
    %1863 = vmatpush1.msra.mxu0 0.0
    %1864 = vmatprep.subr.mxu0 0.0
    %1865 = vmatpush1.msra.mxu0 0.0
    %1866 = vmatprep.subr.mxu0 0.0
    %1867 = vmatpush1.msra.mxu0 0.0
    %1868 = vmatprep.subr.mxu0 0.0
    %1869 = vmatpush1.msra.mxu0 0.0
    %1870 = vmatprep.subr.mxu0 0.0
    %1871 = vmatpush1.msra.mxu0 0.0
    %1872 = vmatprep.subr.mxu0 0.0
    %1873 = vmatpush1.msra.mxu0 0.0
    %1874 = vmatprep.subr.mxu0 0.0
    %1875 = vmatpush1.msra.mxu0 0.0
    %1876 = vmatprep.subr.mxu0 0.0
    %1877 = vmatpush1.msra.mxu0 0.0
    %1878 = vmatprep.subr.mxu0 0.0
    %1879 = vmatpush1.msra.mxu0 0.0
    %1880 = vmatprep.subr.mxu0 0.0
    %1881 = vmatpush1.msra.mxu0 0.0
    %1882 = vmatprep.subr.mxu0 0.0
    %1883 = vmatpush1.msra.mxu0 0.0
    %1884 = vmatprep.subr.mxu0 0.0
    %1885 = vmatpush1.msra.mxu0 0.0
    %1886 = vmatprep.subr.mxu0 0.0
    %1887 = vmatpush1.msra.mxu0 0.0
    %1888 = vmatprep.subr.mxu0 0.0
    %1889 = vmatpush1.msra.mxu0 0.0
    %1890 = vmatprep.subr.mxu0 0.0
    %1891 = vmatpush1.msra.mxu0 0.0
    %1892 = vmatprep.subr.mxu0 0.0
    %1893 = vmatpush1.msra.mxu0 0.0
    %1894 = vmatprep.subr.mxu0 0.0
    %1895 = vmatpush1.msra.mxu0 0.0
    %1896 = vmatprep.subr.mxu0 0.0
    %1897 = vmatpush1.msra.mxu0 0.0
    %1898 = vmatprep.subr.mxu0 0.0
    %1899 = vmatpush1.msra.mxu0 0.0
    %1900 = vmatprep.subr.mxu0 0.0
    %1901 = vmatpush1.msra.mxu0 0.0
    %1902 = vmatprep.mubr.f32.mxu0 0.0
    %1903 = vmatmul.mubr.f32.gmra.mrb[0].mxu0 %v1765
    %v1904 = vpop.f32.mrb[0].mxu0
    %v1905 = vpop.f32.mrb[0].mxu0
    %v1906 = vadd.f32 0.0, %v1905
    %1907 = vdwg.mxu0
    %1908 = vmatprep.subr.mxu0 0.0
    %1909 = vmatpush1.msra.mxu0 %v1738
    %1910 = vmatprep.subr.mxu0 0.0
    %1911 = vmatpush1.msra.mxu0 %v1743
    %1912 = vmatprep.subr.mxu0 0.0
    %1913 = vmatpush1.msra.mxu0 %v1748
    %1914 = vmatprep.subr.mxu0 0.0
    %1915 = vmatpush1.msra.mxu0 0.0
    %1916 = vmatprep.subr.mxu0 0.0
    %1917 = vmatpush1.msra.mxu0 0.0
    %1918 = vmatprep.subr.mxu0 0.0
    %1919 = vmatpush1.msra.mxu0 0.0
    %1920 = vmatprep.subr.mxu0 0.0
    %1921 = vmatpush1.msra.mxu0 0.0
    %1922 = vmatprep.subr.mxu0 0.0
    %1923 = vmatpush1.msra.mxu0 0.0
    %1924 = vmatprep.subr.mxu0 0.0
    %1925 = vmatpush1.msra.mxu0 0.0
    %1926 = vmatprep.subr.mxu0 0.0
    %1927 = vmatpush1.msra.mxu0 0.0
    %1928 = vmatprep.subr.mxu0 0.0
    %1929 = vmatpush1.msra.mxu0 0.0
    %1930 = vmatprep.subr.mxu0 0.0
    %1931 = vmatpush1.msra.mxu0 0.0
    %1932 = vmatprep.subr.mxu0 0.0
    %1933 = vmatpush1.msra.mxu0 0.0
    %1934 = vmatprep.subr.mxu0 0.0
    %1935 = vmatpush1.msra.mxu0 0.0
    %1936 = vmatprep.subr.mxu0 0.0
    %1937 = vmatpush1.msra.mxu0 0.0
    %1938 = vmatprep.subr.mxu0 0.0
    %1939 = vmatpush1.msra.mxu0 0.0
    %1940 = vmatprep.subr.mxu0 0.0
    %1941 = vmatpush1.msra.mxu0 0.0
    %1942 = vmatprep.subr.mxu0 0.0
    %1943 = vmatpush1.msra.mxu0 0.0
    %1944 = vmatprep.subr.mxu0 0.0
    %1945 = vmatpush1.msra.mxu0 0.0
    %1946 = vmatprep.subr.mxu0 0.0
    %1947 = vmatpush1.msra.mxu0 0.0
    %1948 = vmatprep.subr.mxu0 0.0
    %1949 = vmatpush1.msra.mxu0 0.0
    %1950 = vmatprep.subr.mxu0 0.0
    %1951 = vmatpush1.msra.mxu0 0.0
    %1952 = vmatprep.subr.mxu0 0.0
    %1953 = vmatpush1.msra.mxu0 0.0
    %1954 = vmatprep.subr.mxu0 0.0
    %1955 = vmatpush1.msra.mxu0 0.0
    %1956 = vmatprep.subr.mxu0 0.0
    %1957 = vmatpush1.msra.mxu0 0.0
    %1958 = vmatprep.subr.mxu0 0.0
    %1959 = vmatpush1.msra.mxu0 0.0
    %1960 = vmatprep.subr.mxu0 0.0
    %1961 = vmatpush1.msra.mxu0 0.0
    %1962 = vmatprep.subr.mxu0 0.0
    %1963 = vmatpush1.msra.mxu0 0.0
    %1964 = vmatprep.subr.mxu0 0.0
    %1965 = vmatpush1.msra.mxu0 0.0
    %1966 = vmatprep.subr.mxu0 0.0
    %1967 = vmatpush1.msra.mxu0 0.0
    %1968 = vmatprep.subr.mxu0 0.0
    %1969 = vmatpush1.msra.mxu0 0.0
    %1970 = vmatprep.subr.mxu0 0.0
    %1971 = vmatpush1.msra.mxu0 0.0
    %1972 = vmatprep.mubr.f32.mxu0 0.0
    %1973 = vmatmul.mubr.f32.gmra.mrb[0].mxu0 %v1765
    %v1974 = vpop.f32.mrb[0].mxu0
    %v1975 = vadd.f32 0.0, %v1974
    %v1976 = vpop.f32.mrb[0].mxu0
    %1977 = vdwg.mxu0
    %v1978 = vmul.f32 %v1005, %v1834
    %v1979 = vmul.f32 %v1009, %v1836
    %v1980 = vmul.f32 %v1013, %v1906
    %v1981 = vmul.f32 %v1017, %v1975
    %v1982 = vadd.f32 %v1656, %v1978
    %v1983 = vadd.f32 %v1657, %v1979
    %v1984 = vadd.f32 %v1658, %v1980
    %v1985 = vadd.f32 %v1659, %v1981
    %vm1986 = vcmp.gt.f32.partialorder %v1982, 0.0
    %vm1987 = vcmp.gt.f32.partialorder %v1983, 0.0
    %vm1988 = vcmp.gt.f32.partialorder %v1984, 0.0
    %vm1989 = vcmp.gt.f32.partialorder %v1985, 0.0
    %v1990 = vmin.f32 %v1982, 0.0
    %v1991 = vmin.f32 %v1983, 0.0
    %v1992 = vmin.f32 %v1984, 0.0
    %v1993 = vmin.f32 %v1985, 0.0
    %v1994 = vmul.f32 %v1990, 1.442695
    %v1995 = vpow.pop %v1994
    %v1996 = vmul.f32 %v1991, 1.442695
    %v1997 = vpow.pop %v1996
    %v1998 = vmul.f32 %v1992, 1.442695
    %v1999 = vpow.pop %v1998
    %v2000 = vmul.f32 %v1993, 1.442695
    %v2001 = vpow.pop %v2000
    %v2002 = vsub.f32 %v1995, 1.0
    %v2003 = vsub.f32 %v1997, 1.0
    %v2004 = vsub.f32 %v1999, 1.0
    %v2005 = vsub.f32 %v2001, 1.0
    %v2006 = vsel %vm1986, %v1982, %v2002
    %v2007 = vsel %vm1987, %v1983, %v2003
    %v2008 = vsel %vm1988, %v1984, %v2004
    %v2009 = vsel %vm1989, %v1985, %v2005
    %2010 = vst [vmem:[#allocation8] sm:$0xff] %v2006
    %2011 = vst [vmem:[#allocation8 + $0x8] sm:$0xff] %v2007
    %s2012 = scalar_lea.vmem [#allocation8], 16
    %2013 = vst [vmem:[%s2012] sm:$0xff] %v2008
    %2014 = vst [vmem:[%s2012 + $0x8] sm:$0xff] %v2009
    // Predicated region
    $region34: #{tpu_custom_call.1} parent=1 // pred_check
      _
    $region35: #{tpu_custom_call.1} parent=1 // pred_check_branch
      %2016 = sbr.rel (0) target = $region37
    $region36: #{tpu_custom_call.1} parent=1 // pred_region
      %s2018 = ssub.s32 512, 512
      %2019 = vsyncadd [#allocation5], %s2018
      %s2020 = sshll.u32 [#allocation8], 4
      %s2021 = int_to_ptr.vmem [resolvable:$true] %s2020
      %2026 = dma.vmem_to_hbm [thread:$0]  %s2021, 512, %s6, [#allocation5], 256, 256, 16
    $region37: #{tpu_custom_call.1} parent=1 // pred_fallthru
      _
    // Predicated region
    $region38: #{tpu_custom_call.1} parent=1 // pred_check
      _
    $region39: #{tpu_custom_call.1} parent=1 // pred_check_branch
      %2028 = sbr.rel (0) target = $region41
    $region40: #{tpu_custom_call.1} parent=1 // pred_region
      %2029 = dma.done [#allocation5], 512
    $region41: #{tpu_custom_call.1} parent=1 // pred_fallthru
      _
    %2030 = vsyncpa [#allocation4], 1
    %2031 = vsyncpa [#allocation7], 1
    %2032 = vsyncpa [#allocation5], 1

</llo_original>
